<compile_context>
chip_gen: v7x
topology: tpu7x:2x2x1
jax: 0.10.0
libtpu: 0.0.40
codegen_flags: <defaults>
</compile_context>

<pallas_src>
import math

import jax
import jax.numpy as jnp
from jax.experimental import pallas as pl
from jax.experimental.pallas import tpu as pltpu

# ---------------------------------------------------------------------------
# Model dimensions (mirror the PyTorch __init__ defaults)
# ---------------------------------------------------------------------------
NUM_CHARACTERS = 32
NUM_ACTION_STATES = 383
STATE_SIZE = 10
CHARACTER_DIM = 10
ACTION_STATE_DIM = 32
PLAYER_HIDDEN = 64
PLAYER_OUTPUT_DIM = 29

NUM_STAGES = 32
STAGE_DIM = 6
GAME_HIDDEN = 128
OUTPUT_DIM = 16  # GameLayer(output_dim) — chosen small output size

DEFAULT_BATCH_TILE = 1024   # fits default scoped VMEM on v5e/v6e/v7x (bf16 acts)
ROW_GRANULE = 16            # sublane granularity (safe for bf16 packing)


def _round_up(x, m):
    return ((x + m - 1) // m) * m


# ---------------------------------------------------------------------------
# Pallas kernel: one batch tile of the fully-collapsed affine map
# ---------------------------------------------------------------------------
def game_layer_kernel(xc0_ref, xa0_ref, xs0_ref, xc1_ref, xa1_ref, xs1_ref, xg_ref,
                      wc0_ref, wa0_ref, ws0_ref, wc1_ref, wa1_ref, ws1_ref, wg_ref,
                      b_ref, o_ref):
    def mm(x_ref, w_ref):
        return jnp.dot(x_ref[...], w_ref[...], preferred_element_type=jnp.float32)

    acc = mm(xa0_ref, wa0_ref)            # largest-K matmuls first (K=383)
    acc = acc + mm(xa1_ref, wa1_ref)
    acc = acc + mm(xc0_ref, wc0_ref)      # K=32
    acc = acc + mm(xc1_ref, wc1_ref)
    acc = acc + mm(xg_ref, wg_ref)        # K=32
    acc = acc + mm(xs0_ref, ws0_ref)      # K=10
    acc = acc + mm(xs1_ref, ws1_ref)
    o_ref[...] = acc + b_ref[...]         # f32 bias add, f32 store


# ---------------------------------------------------------------------------
# Parameter initialization (deterministic, PyTorch-Linear-style uniform init)
# ---------------------------------------------------------------------------
def _init_linear(key, in_dim, out_dim):
    kw, kb = jax.random.split(key)
    bound = 1.0 / math.sqrt(in_dim)
    w = jax.random.uniform(kw, (in_dim, out_dim), jnp.float32, -bound, bound)
    b = jax.random.uniform(kb, (1, out_dim), jnp.float32, -bound, bound)
    return w, b


def init_player_params(key):
    keys = jax.random.split(key, 6)
    p = {}
    p["cw1"], p["cb1"] = _init_linear(keys[0], NUM_CHARACTERS, 32)
    p["cw2"], p["cb2"] = _init_linear(keys[1], 32, CHARACTER_DIM)
    p["aw1"], p["ab1"] = _init_linear(keys[2], NUM_ACTION_STATES, 64)
    p["aw2"], p["ab2"] = _init_linear(keys[3], 64, ACTION_STATE_DIM)
    concat_dim = CHARACTER_DIM + ACTION_STATE_DIM + STATE_SIZE  # 52
    p["pw1"], p["pb1"] = _init_linear(keys[4], concat_dim, PLAYER_HIDDEN)
    p["pw2"], p["pb2"] = _init_linear(keys[5], PLAYER_HIDDEN, PLAYER_OUTPUT_DIM)
    return p


def init_game_params(key):
    k0, k1, k2, k3, k4, k5 = jax.random.split(key, 6)
    g = {"p0": init_player_params(k0), "p1": init_player_params(k1)}
    g["sw1"], g["sb1"] = _init_linear(k2, NUM_STAGES, 32)
    g["sw2"], g["sb2"] = _init_linear(k3, 32, STAGE_DIM)
    concat_dim = 2 * PLAYER_OUTPUT_DIM + STAGE_DIM  # 64
    g["gw1"], g["gb1"] = _init_linear(k4, concat_dim, GAME_HIDDEN)
    g["gw2"], g["gb2"] = _init_linear(k5, GAME_HIDDEN, OUTPUT_DIM)
    return g


# ---------------------------------------------------------------------------
# Parameter packing: collapse the whole (purely linear) network offline.
# Exact up to f32 rounding order; must be redone if nonlinearities are added.
# ---------------------------------------------------------------------------
def pack_game_params(g, compute_dtype=jnp.bfloat16):
    gw1, gw2, gb1, gb2 = g["gw1"], g["gw2"], g["gb1"], g["gb2"]
    gw1_p0 = gw1[:PLAYER_OUTPUT_DIM]                       # (29, 128)
    gw1_p1 = gw1[PLAYER_OUTPUT_DIM:2 * PLAYER_OUTPUT_DIM]  # (29, 128)
    gw1_s = gw1[2 * PLAYER_OUTPUT_DIM:]                    # (6, 128)
    head_p0 = gw1_p0 @ gw2                                 # (29, OUT)
    head_p1 = gw1_p1 @ gw2                                 # (29, OUT)
    head_s = gw1_s @ gw2                                   # (6, OUT)

    def fuse_player(p, head):
        pw1_c = p["pw1"][:CHARACTER_DIM]                                    # (10, 64)
        pw1_a = p["pw1"][CHARACTER_DIM:CHARACTER_DIM + ACTION_STATE_DIM]    # (32, 64)
        pw1_s = p["pw1"][CHARACTER_DIM + ACTION_STATE_DIM:]                 # (10, 64)
        pw2_head = p["pw2"] @ head                                          # (64, OUT)
        tail_c = pw1_c @ pw2_head                                           # (10, OUT)
        tail_a = pw1_a @ pw2_head                                           # (32, OUT)
        tail_s = pw1_s @ pw2_head                                           # (10, OUT)
        wc = p["cw1"] @ (p["cw2"] @ tail_c)                                 # (32, OUT)
        wa = p["aw1"] @ (p["aw2"] @ tail_a)                                 # (383, OUT)
        ws = tail_s                                                         # (10, OUT)
        bc = p["cb1"] @ p["cw2"] + p["cb2"]                                 # (1, 10)
        ba = p["ab1"] @ p["aw2"] + p["ab2"]                                 # (1, 32)
        b = bc @ tail_c + ba @ tail_a + (p["pb1"] @ p["pw2"] + p["pb2"]) @ head
        return wc, wa, ws, b

    Wc0, Wa0, Ws0, b0 = fuse_player(g["p0"], head_p0)
    Wc1, Wa1, Ws1, b1 = fuse_player(g["p1"], head_p1)

    Wstage = g["sw1"] @ (g["sw2"] @ head_s)                       # (32, OUT)
    b_stage = (g["sb1"] @ g["sw2"] + g["sb2"]) @ head_s           # (1, OUT)

    bias = b0 + b1 + b_stage + gb1 @ gw2 + gb2                    # (1, OUT), f32

    weights = [Wc0, Wa0, Ws0, Wc1, Wa1, Ws1, Wstage]
    return {"weights": [w.astype(compute_dtype) for w in weights],
            "bias": bias.astype(jnp.float32),
            "compute_dtype": compute_dtype}


# ---------------------------------------------------------------------------
# Wrapper around pallas_call
# ---------------------------------------------------------------------------
def game_layer_forward(x_player0, x_player1, x_stage, packed,
                       *, batch_tile=DEFAULT_BATCH_TILE):
    xc0, xa0, xs0 = x_player0
    xc1, xa1, xs1 = x_player1
    acts = [xc0, xa0, xs0, xc1, xa1, xs1, x_stage]

    B = xc0.shape[0]
    TB = min(batch_tile, _round_up(B, ROW_GRANULE))
    B_pad = _round_up(B, TB)
    # v7x has 2 TensorCores: make sure the "parallel" batch grid has >= 2 steps.
    if B_pad // TB < 2 and TB > ROW_GRANULE:
        TB = _round_up(TB // 2, ROW_GRANULE)
        B_pad = _round_up(B, TB)

    compute_dtype = packed["compute_dtype"]
    acts = [a.astype(compute_dtype) for a in acts]
    if B_pad != B:  # only pads ragged tails; no pad copy when TB divides B
        acts = [jnp.pad(a, ((0, B_pad - B), (0, 0))) for a in acts]

    weights = packed["weights"]
    bias = packed["bias"]

    grid = (B_pad // TB,)

    def act_spec(d):
        return pl.BlockSpec((TB, d), lambda i: (i, 0))

    def resident_spec(arr):
        # Full-array block, same block index every step -> single DMA, stays in VMEM.
        return pl.BlockSpec(arr.shape, lambda i: (0, 0))

    in_specs = ([act_spec(a.shape[1]) for a in acts]
                + [resident_spec(w) for w in weights]
                + [resident_spec(bias)])

    out = pl.pallas_call(
        game_layer_kernel,
        out_shape=jax.ShapeDtypeStruct((B_pad, OUTPUT_DIM), jnp.float32),
        grid=grid,
        in_specs=in_specs,
        out_specs=pl.BlockSpec((TB, OUTPUT_DIM), lambda i: (i, 0)),
        compiler_params=pltpu.CompilerParams(
            dimension_semantics=("parallel",)),
    )(*acts, *weights, bias)

    return out[:B]


# ---------------------------------------------------------------------------
# Pure-JAX reference (mirrors the original PyTorch math, unpacked f32 params)
# ---------------------------------------------------------------------------
def _reference_forward(x_player0, x_player1, x_stage, g):
    def player(xc, xa, xs, p):
        c = (xc @ p["cw1"] + p["cb1"]) @ p["cw2"] + p["cb2"]
        a = (xa @ p["aw1"] + p["ab1"]) @ p["aw2"] + p["ab2"]
        h = jnp.concatenate([c, a, xs], axis=1) @ p["pw1"] + p["pb1"]
        return h @ p["pw2"] + p["pb2"]

    p0 = player(*x_player0, g["p0"])
    p1 = player(*x_player1, g["p1"])
    s = (x_stage @ g["sw1"] + g["sb1"]) @ g["sw2"] + g["sb2"]
    h = jnp.concatenate([p0, p1, s], axis=1) @ g["gw1"] + g["gb1"]
    return h @ g["gw2"] + g["gb2"]


# ---------------------------------------------------------------------------
if __name__ == "__main__":
    B = 256  # small batch; yields two 128-row grid steps
    key = jax.random.PRNGKey(0)
    k_par, k0, k1, k2, k3, k4, k5, k6 = jax.random.split(key, 8)

    raw_params = init_game_params(k_par)
    packed_params = pack_game_params(raw_params)

    x_player0 = (jax.random.normal(k0, (B, NUM_CHARACTERS), jnp.float32),
                 jax.random.normal(k1, (B, NUM_ACTION_STATES), jnp.float32),
                 jax.random.normal(k2, (B, STATE_SIZE), jnp.float32))
    x_player1 = (jax.random.normal(k3, (B, NUM_CHARACTERS), jnp.float32),
                 jax.random.normal(k4, (B, NUM_ACTION_STATES), jnp.float32),
                 jax.random.normal(k5, (B, STATE_SIZE), jnp.float32))
    x_stage = jax.random.normal(k6, (B, NUM_STAGES), jnp.float32)

    out = game_layer_forward(x_player0, x_player1, x_stage, packed_params)
    out = jax.block_until_ready(out)

    ref = _reference_forward(x_player0, x_player1, x_stage, raw_params)
    assert out.shape == (B, OUTPUT_DIM)
    # bf16 operands (f32 accumulate) + fold rounding order => loosened tolerance.
    assert jnp.allclose(out, ref, atol=2e-2, rtol=2e-2), "kernel mismatch vs reference"

    print("KERNEL_OK")
</pallas_src>

<mosaic_0001>
module attributes {stable_mosaic.version = 11 : i64} {
  func.func @game_layer_kernel(%arg0: i32, %arg1: memref<128x32xbf16, #tpu.memory_space<vmem>>, %arg2: memref<128x383xbf16, #tpu.memory_space<vmem>>, %arg3: memref<128x10xbf16, #tpu.memory_space<vmem>>, %arg4: memref<128x32xbf16, #tpu.memory_space<vmem>>, %arg5: memref<128x383xbf16, #tpu.memory_space<vmem>>, %arg6: memref<128x10xbf16, #tpu.memory_space<vmem>>, %arg7: memref<128x32xbf16, #tpu.memory_space<vmem>>, %arg8: memref<32x16xbf16, #tpu.memory_space<vmem>>, %arg9: memref<383x16xbf16, #tpu.memory_space<vmem>>, %arg10: memref<10x16xbf16, #tpu.memory_space<vmem>>, %arg11: memref<32x16xbf16, #tpu.memory_space<vmem>>, %arg12: memref<383x16xbf16, #tpu.memory_space<vmem>>, %arg13: memref<10x16xbf16, #tpu.memory_space<vmem>>, %arg14: memref<32x16xbf16, #tpu.memory_space<vmem>>, %arg15: memref<1x16xf32, #tpu.memory_space<vmem>>, %arg16: memref<128x16xf32, #tpu.memory_space<vmem>>) attributes {dimension_semantics = [#tpu.dimension_semantics<parallel>], iteration_bounds = array<i64: 2>, scalar_prefetch = 0 : i64, scratch_operands = 0 : i64, tpu.core_type = #tpu.core_type<tc>, window_params = [{transform_indices = @transform_0, window_bounds = array<i64: 128, 32>}, {transform_indices = @transform_1, window_bounds = array<i64: 128, 383>}, {transform_indices = @transform_2, window_bounds = array<i64: 128, 10>}, {transform_indices = @transform_3, window_bounds = array<i64: 128, 32>}, {transform_indices = @transform_4, window_bounds = array<i64: 128, 383>}, {transform_indices = @transform_5, window_bounds = array<i64: 128, 10>}, {transform_indices = @transform_6, window_bounds = array<i64: 128, 32>}, {pipeline_mode = #tpu.pipeline_mode<synchronous>, transform_indices = @transform_7, window_bounds = array<i64: 32, 16>}, {pipeline_mode = #tpu.pipeline_mode<synchronous>, transform_indices = @transform_8, window_bounds = array<i64: 383, 16>}, {pipeline_mode = #tpu.pipeline_mode<synchronous>, transform_indices = @transform_9, window_bounds = array<i64: 10, 16>}, {pipeline_mode = #tpu.pipeline_mode<synchronous>, transform_indices = @transform_10, window_bounds = array<i64: 32, 16>}, {pipeline_mode = #tpu.pipeline_mode<synchronous>, transform_indices = @transform_11, window_bounds = array<i64: 383, 16>}, {pipeline_mode = #tpu.pipeline_mode<synchronous>, transform_indices = @transform_12, window_bounds = array<i64: 10, 16>}, {pipeline_mode = #tpu.pipeline_mode<synchronous>, transform_indices = @transform_13, window_bounds = array<i64: 32, 16>}, {pipeline_mode = #tpu.pipeline_mode<synchronous>, transform_indices = @transform_14, window_bounds = array<i64: 1, 16>}, {transform_indices = @transform_15, window_bounds = array<i64: 128, 16>}]} {
    %c0 = arith.constant 0 : index
    %c0_0 = arith.constant 0 : index
    %0 = vector.load %arg2[%c0, %c0_0] : memref<128x383xbf16, #tpu.memory_space<vmem>>, vector<128x383xbf16>
    %c0_1 = arith.constant 0 : index
    %c0_2 = arith.constant 0 : index
    %1 = vector.load %arg9[%c0_1, %c0_2] : memref<383x16xbf16, #tpu.memory_space<vmem>>, vector<383x16xbf16>
    %cst = arith.constant dense<0.000000e+00> : vector<128x16xf32>
    %2 = tpu.matmul %0, %1, %cst {dimension_numbers = #tpu.dot_dimension_numbers<[1], [0], [0], [1], [0, 0, 1, 1], [], []>} : vector<128x383xbf16>, vector<383x16xbf16>, vector<128x16xf32> -> vector<128x16xf32>
    %c0_3 = arith.constant 0 : index
    %c0_4 = arith.constant 0 : index
    %3 = vector.load %arg5[%c0_3, %c0_4] : memref<128x383xbf16, #tpu.memory_space<vmem>>, vector<128x383xbf16>
    %c0_5 = arith.constant 0 : index
    %c0_6 = arith.constant 0 : index
    %4 = vector.load %arg12[%c0_5, %c0_6] : memref<383x16xbf16, #tpu.memory_space<vmem>>, vector<383x16xbf16>
    %cst_7 = arith.constant dense<0.000000e+00> : vector<128x16xf32>
    %5 = tpu.matmul %3, %4, %cst_7 {dimension_numbers = #tpu.dot_dimension_numbers<[1], [0], [0], [1], [0, 0, 1, 1], [], []>} : vector<128x383xbf16>, vector<383x16xbf16>, vector<128x16xf32> -> vector<128x16xf32>
    %6 = arith.addf %2, %5 : vector<128x16xf32>
    %c0_8 = arith.constant 0 : index
    %c0_9 = arith.constant 0 : index
    %7 = vector.load %arg1[%c0_8, %c0_9] : memref<128x32xbf16, #tpu.memory_space<vmem>>, vector<128x32xbf16>
    %c0_10 = arith.constant 0 : index
    %c0_11 = arith.constant 0 : index
    %8 = vector.load %arg8[%c0_10, %c0_11] : memref<32x16xbf16, #tpu.memory_space<vmem>>, vector<32x16xbf16>
    %cst_12 = arith.constant dense<0.000000e+00> : vector<128x16xf32>
    %9 = tpu.matmul %7, %8, %cst_12 {dimension_numbers = #tpu.dot_dimension_numbers<[1], [0], [0], [1], [0, 0, 1, 1], [], []>} : vector<128x32xbf16>, vector<32x16xbf16>, vector<128x16xf32> -> vector<128x16xf32>
    %10 = arith.addf %6, %9 : vector<128x16xf32>
    %c0_13 = arith.constant 0 : index
    %c0_14 = arith.constant 0 : index
    %11 = vector.load %arg4[%c0_13, %c0_14] : memref<128x32xbf16, #tpu.memory_space<vmem>>, vector<128x32xbf16>
    %c0_15 = arith.constant 0 : index
    %c0_16 = arith.constant 0 : index
    %12 = vector.load %arg11[%c0_15, %c0_16] : memref<32x16xbf16, #tpu.memory_space<vmem>>, vector<32x16xbf16>
    %cst_17 = arith.constant dense<0.000000e+00> : vector<128x16xf32>
    %13 = tpu.matmul %11, %12, %cst_17 {dimension_numbers = #tpu.dot_dimension_numbers<[1], [0], [0], [1], [0, 0, 1, 1], [], []>} : vector<128x32xbf16>, vector<32x16xbf16>, vector<128x16xf32> -> vector<128x16xf32>
    %14 = arith.addf %10, %13 : vector<128x16xf32>
    %c0_18 = arith.constant 0 : index
    %c0_19 = arith.constant 0 : index
    %15 = vector.load %arg7[%c0_18, %c0_19] : memref<128x32xbf16, #tpu.memory_space<vmem>>, vector<128x32xbf16>
    %c0_20 = arith.constant 0 : index
    %c0_21 = arith.constant 0 : index
    %16 = vector.load %arg14[%c0_20, %c0_21] : memref<32x16xbf16, #tpu.memory_space<vmem>>, vector<32x16xbf16>
    %cst_22 = arith.constant dense<0.000000e+00> : vector<128x16xf32>
    %17 = tpu.matmul %15, %16, %cst_22 {dimension_numbers = #tpu.dot_dimension_numbers<[1], [0], [0], [1], [0, 0, 1, 1], [], []>} : vector<128x32xbf16>, vector<32x16xbf16>, vector<128x16xf32> -> vector<128x16xf32>
    %18 = arith.addf %14, %17 : vector<128x16xf32>
    %c0_23 = arith.constant 0 : index
    %c0_24 = arith.constant 0 : index
    %19 = vector.load %arg3[%c0_23, %c0_24] : memref<128x10xbf16, #tpu.memory_space<vmem>>, vector<128x10xbf16>
    %c0_25 = arith.constant 0 : index
    %c0_26 = arith.constant 0 : index
    %20 = vector.load %arg10[%c0_25, %c0_26] : memref<10x16xbf16, #tpu.memory_space<vmem>>, vector<10x16xbf16>
    %cst_27 = arith.constant dense<0.000000e+00> : vector<128x16xf32>
    %21 = tpu.matmul %19, %20, %cst_27 {dimension_numbers = #tpu.dot_dimension_numbers<[1], [0], [0], [1], [0, 0, 1, 1], [], []>} : vector<128x10xbf16>, vector<10x16xbf16>, vector<128x16xf32> -> vector<128x16xf32>
    %22 = arith.addf %18, %21 : vector<128x16xf32>
    %c0_28 = arith.constant 0 : index
    %c0_29 = arith.constant 0 : index
    %23 = vector.load %arg6[%c0_28, %c0_29] : memref<128x10xbf16, #tpu.memory_space<vmem>>, vector<128x10xbf16>
    %c0_30 = arith.constant 0 : index
    %c0_31 = arith.constant 0 : index
    %24 = vector.load %arg13[%c0_30, %c0_31] : memref<10x16xbf16, #tpu.memory_space<vmem>>, vector<10x16xbf16>
    %cst_32 = arith.constant dense<0.000000e+00> : vector<128x16xf32>
    %25 = tpu.matmul %23, %24, %cst_32 {dimension_numbers = #tpu.dot_dimension_numbers<[1], [0], [0], [1], [0, 0, 1, 1], [], []>} : vector<128x10xbf16>, vector<10x16xbf16>, vector<128x16xf32> -> vector<128x16xf32>
    %26 = arith.addf %22, %25 : vector<128x16xf32>
    %c0_33 = arith.constant 0 : index
    %c0_34 = arith.constant 0 : index
    %27 = vector.load %arg15[%c0_33, %c0_34] : memref<1x16xf32, #tpu.memory_space<vmem>>, vector<1x16xf32>
    %28 = vector.broadcast %27 : vector<1x16xf32> to vector<128x16xf32>
    %29 = arith.addf %26, %28 : vector<128x16xf32>
    %c0_35 = arith.constant 0 : index
    %c0_36 = arith.constant 0 : index
    %30 = vector.load %arg16[%c0_35, %c0_36] : memref<128x16xf32, #tpu.memory_space<vmem>>, vector<128x16xf32>
    tpu.vector_store %arg16[%c0_35, %c0_36], %29 {strides = array<i32>} : memref<128x16xf32, #tpu.memory_space<vmem>>, vector<128x16xf32>,
    return
  }
  func.func @transform_0(%arg0: i32) -> (i32, i32) {
    %c0_i32 = arith.constant 0 : i32
    %c0_i32_0 = arith.constant 0 : i32
    return %arg0, %c0_i32 : i32, i32
  }
  func.func @transform_1(%arg0: i32) -> (i32, i32) {
    %c0_i32 = arith.constant 0 : i32
    %c0_i32_0 = arith.constant 0 : i32
    return %arg0, %c0_i32 : i32, i32
  }
  func.func @transform_2(%arg0: i32) -> (i32, i32) {
    %c0_i32 = arith.constant 0 : i32
    %c0_i32_0 = arith.constant 0 : i32
    return %arg0, %c0_i32 : i32, i32
  }
  func.func @transform_3(%arg0: i32) -> (i32, i32) {
    %c0_i32 = arith.constant 0 : i32
    %c0_i32_0 = arith.constant 0 : i32
    return %arg0, %c0_i32 : i32, i32
  }
  func.func @transform_4(%arg0: i32) -> (i32, i32) {
    %c0_i32 = arith.constant 0 : i32
    %c0_i32_0 = arith.constant 0 : i32
    return %arg0, %c0_i32 : i32, i32
  }
  func.func @transform_5(%arg0: i32) -> (i32, i32) {
    %c0_i32 = arith.constant 0 : i32
    %c0_i32_0 = arith.constant 0 : i32
    return %arg0, %c0_i32 : i32, i32
  }
  func.func @transform_6(%arg0: i32) -> (i32, i32) {
    %c0_i32 = arith.constant 0 : i32
    %c0_i32_0 = arith.constant 0 : i32
    return %arg0, %c0_i32 : i32, i32
  }
  func.func @transform_7(%arg0: i32) -> (i32, i32) {
    %c0_i32 = arith.constant 0 : i32
    %c0_i32_0 = arith.constant 0 : i32
    %c0_i32_1 = arith.constant 0 : i32
    return %c0_i32, %c0_i32_0 : i32, i32
  }
  func.func @transform_8(%arg0: i32) -> (i32, i32) {
    %c0_i32 = arith.constant 0 : i32
    %c0_i32_0 = arith.constant 0 : i32
    %c0_i32_1 = arith.constant 0 : i32
    return %c0_i32, %c0_i32_0 : i32, i32
  }
  func.func @transform_9(%arg0: i32) -> (i32, i32) {
    %c0_i32 = arith.constant 0 : i32
    %c0_i32_0 = arith.constant 0 : i32
    %c0_i32_1 = arith.constant 0 : i32
    return %c0_i32, %c0_i32_0 : i32, i32
  }
  func.func @transform_10(%arg0: i32) -> (i32, i32) {
    %c0_i32 = arith.constant 0 : i32
    %c0_i32_0 = arith.constant 0 : i32
    %c0_i32_1 = arith.constant 0 : i32
    return %c0_i32, %c0_i32_0 : i32, i32
  }
  func.func @transform_11(%arg0: i32) -> (i32, i32) {
    %c0_i32 = arith.constant 0 : i32
    %c0_i32_0 = arith.constant 0 : i32
    %c0_i32_1 = arith.constant 0 : i32
    return %c0_i32, %c0_i32_0 : i32, i32
  }
  func.func @transform_12(%arg0: i32) -> (i32, i32) {
    %c0_i32 = arith.constant 0 : i32
    %c0_i32_0 = arith.constant 0 : i32
    %c0_i32_1 = arith.constant 0 : i32
    return %c0_i32, %c0_i32_0 : i32, i32
  }
  func.func @transform_13(%arg0: i32) -> (i32, i32) {
    %c0_i32 = arith.constant 0 : i32
    %c0_i32_0 = arith.constant 0 : i32
    %c0_i32_1 = arith.constant 0 : i32
    return %c0_i32, %c0_i32_0 : i32, i32
  }
  func.func @transform_14(%arg0: i32) -> (i32, i32) {
    %c0_i32 = arith.constant 0 : i32
    %c0_i32_0 = arith.constant 0 : i32
    %c0_i32_1 = arith.constant 0 : i32
    return %c0_i32, %c0_i32_0 : i32, i32
  }
  func.func @transform_15(%arg0: i32) -> (i32, i32) {
    %c0_i32 = arith.constant 0 : i32
    %c0_i32_0 = arith.constant 0 : i32
    return %arg0, %c0_i32 : i32, i32
  }
}

</mosaic_0001>

<llo_original>
// kernel: tpu_custom_call.1
$region0: #{tpu_custom_call.1}
  #allocation0 [shape = 'u32[]', space=smem, size = 0x4, offset = 0x4, fixed_abs, tag = 'smem constant byte address 0x4 - core index']
  #allocation1 [shape = 'u32[144,128]{1,0:T(1,128)}', space=vmem, size = 0x12000, scoped, tag = 'internal scratch']
  %s0 = inlined_call_operand.vmem [shape: bf16[256,32], index: 0, kind: input, shape index: {}]
  %s1 = inlined_call_operand.vmem [shape: bf16[256,383], index: 1, kind: input, shape index: {}]
  %s2 = inlined_call_operand.vmem [shape: bf16[256,10], index: 2, kind: input, shape index: {}]
  %s3 = inlined_call_operand.vmem [shape: bf16[256,32], index: 3, kind: input, shape index: {}]
  %s4 = inlined_call_operand.vmem [shape: bf16[256,383], index: 4, kind: input, shape index: {}]
  %s5 = inlined_call_operand.vmem [shape: bf16[256,10], index: 5, kind: input, shape index: {}]
  %s6 = inlined_call_operand.vmem [shape: bf16[256,32], index: 6, kind: input, shape index: {}]
  %s7 = inlined_call_operand.vmem [shape: bf16[32,16], index: 7, kind: input, shape index: {}]
  %s8 = inlined_call_operand.vmem [shape: bf16[383,16], index: 8, kind: input, shape index: {}]
  %s9 = inlined_call_operand.vmem [shape: bf16[10,16], index: 9, kind: input, shape index: {}]
  %s10 = inlined_call_operand.vmem [shape: bf16[32,16], index: 10, kind: input, shape index: {}]
  %s11 = inlined_call_operand.vmem [shape: bf16[383,16], index: 11, kind: input, shape index: {}]
  %s12 = inlined_call_operand.vmem [shape: bf16[10,16], index: 12, kind: input, shape index: {}]
  %s13 = inlined_call_operand.vmem [shape: bf16[32,16], index: 13, kind: input, shape index: {}]
  %s14 = inlined_call_operand.vmem [shape: f32[1,16], index: 14, kind: input, shape index: {}]
  %s15 = inlined_call_operand.vmem [shape: f32[256,16], index: 15, kind: output, shape index: {}]
  %s16 = sld [smem:[#allocation0]]
  $region93: #{tpu_custom_call.1} parent=0
    _
  %s18 = ssub.s32 1, %s16
  %s19 = scalar_select 0, %s18, %s16
  loop: start=0, step=1, limit=4
  $region2: #{tpu_custom_call.1} parent=0 // loop_pre_header
    _
  $region3: #{tpu_custom_call.1} parent=0 // loop_header
    %s21 = sphi 0, %s25
    %p22 = scmp.ge.s32.totalorder %s21, 4
    %s31 = sphi 0, %s33
    %s34 = sphi 0, %s31
    %s35 = sphi 0, %s34
    %s51 = sphi 0, %s35
    %s57 = sphi 0, %s59
    %s60 = sphi 0, %s57
    %s61 = sphi 0, %s60
    %s77 = sphi 0, %s61
    %s83 = sphi 0, %s85
    %s86 = sphi 0, %s83
    %s87 = sphi 0, %s86
    %s103 = sphi 0, %s87
    %s109 = sphi 0, %s111
    %s112 = sphi 0, %s109
    %s113 = sphi 0, %s112
    %s129 = sphi 0, %s113
    %s135 = sphi 0, %s137
    %s138 = sphi 0, %s135
    %s139 = sphi 0, %s138
    %s155 = sphi 0, %s139
    %s161 = sphi 0, %s163
    %s164 = sphi 0, %s161
    %s165 = sphi 0, %s164
    %s181 = sphi 0, %s165
    %s187 = sphi 0, %s189
    %s190 = sphi 0, %s187
    %s191 = sphi 0, %s190
    %s207 = sphi 0, %s191
    %s211 = sphi 0, %s211
    %s213 = sphi 0, %s211
    %s214 = sphi 0, %s213
    %s228 = sphi 0, %s214
    %s232 = sphi 0, %s232
    %s234 = sphi 0, %s232
    %s235 = sphi 0, %s234
    %s249 = sphi 0, %s235
    %s253 = sphi 0, %s253
    %s255 = sphi 0, %s253
    %s256 = sphi 0, %s255
    %s270 = sphi 0, %s256
    %s274 = sphi 0, %s274
    %s276 = sphi 0, %s274
    %s277 = sphi 0, %s276
    %s291 = sphi 0, %s277
    %s295 = sphi 0, %s295
    %s297 = sphi 0, %s295
    %s298 = sphi 0, %s297
    %s312 = sphi 0, %s298
    %s316 = sphi 0, %s316
    %s318 = sphi 0, %s316
    %s319 = sphi 0, %s318
    %s333 = sphi 0, %s319
    %s337 = sphi 0, %s337
    %s339 = sphi 0, %s337
    %s340 = sphi 0, %s339
    %s354 = sphi 0, %s340
    %s358 = sphi 0, %s358
    %s360 = sphi 0, %s358
    %s361 = sphi 0, %s360
    %s375 = sphi 0, %s361
    %s381 = sphi 0, %s383
    %s384 = sphi 0, %s381
    %s385 = sphi 0, %s384
    %s401 = sphi 0, %s385
  $region4: #{tpu_custom_call.1} parent=0 // loop_header_branch
    %24 = sbr.rel (%p22) target = $region8
  $region5: #{tpu_custom_call.1} parent=0 // loop_body
    %s26 = ssub.s32 %s21, 1
    %s27 = ssub.s32 %s21, 2
    %s28 = sadd.s32 %s21, 1
    %s29 = ssub.s32 %s21, %s28
    %p30 = scmp.eq.s32.totalorder %s29, 0
    %s32 = sadd.s32 %s31, 1
    %s33 = scalar_select %p30, %s31, %s32
    %p36 = pneg %p30
    %p37 = scmp.eq.s32.totalorder %s21, 1
    %p38 = por %p36, %p37
    %p39 = scmp.ne.s32.totalorder %s31, %s34
    %p40 = scmp.eq.s32.totalorder %s21, 0
    %p41 = por %p39, %p40
    %p42 = scmp.ne.s32.totalorder %s31, %s34
    %p43 = scmp.eq.s32.totalorder %s26, 1
    %p44 = por %p42, %p43
    %p45 = scmp.ne.s32.totalorder %s34, %s35
    %p46 = scmp.eq.s32.totalorder %s26, 0
    %p47 = por %p45, %p46
    %p48 = scmp.ne.s32.totalorder %s34, %s35
    %p49 = scmp.eq.s32.totalorder %s27, 1
    %p50 = por %p48, %p49
    %p52 = scmp.ne.s32.totalorder %s35, %s51
    %p53 = scmp.eq.s32.totalorder %s27, 0
    %p54 = por %p52, %p53
    %s55 = ssub.s32 %s21, %s28
    %p56 = scmp.eq.s32.totalorder %s55, 0
    %s58 = sadd.s32 %s57, 1
    %s59 = scalar_select %p56, %s57, %s58
    %p62 = pneg %p56
    %p63 = scmp.eq.s32.totalorder %s21, 1
    %p64 = por %p62, %p63
    %p65 = scmp.ne.s32.totalorder %s57, %s60
    %p66 = scmp.eq.s32.totalorder %s21, 0
    %p67 = por %p65, %p66
    %p68 = scmp.ne.s32.totalorder %s57, %s60
    %p69 = scmp.eq.s32.totalorder %s26, 1
    %p70 = por %p68, %p69
    %p71 = scmp.ne.s32.totalorder %s60, %s61
    %p72 = scmp.eq.s32.totalorder %s26, 0
    %p73 = por %p71, %p72
    %p74 = scmp.ne.s32.totalorder %s60, %s61
    %p75 = scmp.eq.s32.totalorder %s27, 1
    %p76 = por %p74, %p75
    %p78 = scmp.ne.s32.totalorder %s61, %s77
    %p79 = scmp.eq.s32.totalorder %s27, 0
    %p80 = por %p78, %p79
    %s81 = ssub.s32 %s21, %s28
    %p82 = scmp.eq.s32.totalorder %s81, 0
    %s84 = sadd.s32 %s83, 1
    %s85 = scalar_select %p82, %s83, %s84
    %p88 = pneg %p82
    %p89 = scmp.eq.s32.totalorder %s21, 1
    %p90 = por %p88, %p89
    %p91 = scmp.ne.s32.totalorder %s83, %s86
    %p92 = scmp.eq.s32.totalorder %s21, 0
    %p93 = por %p91, %p92
    %p94 = scmp.ne.s32.totalorder %s83, %s86
    %p95 = scmp.eq.s32.totalorder %s26, 1
    %p96 = por %p94, %p95
    %p97 = scmp.ne.s32.totalorder %s86, %s87
    %p98 = scmp.eq.s32.totalorder %s26, 0
    %p99 = por %p97, %p98
    %p100 = scmp.ne.s32.totalorder %s86, %s87
    %p101 = scmp.eq.s32.totalorder %s27, 1
    %p102 = por %p100, %p101
    %p104 = scmp.ne.s32.totalorder %s87, %s103
    %p105 = scmp.eq.s32.totalorder %s27, 0
    %p106 = por %p104, %p105
    %s107 = ssub.s32 %s21, %s28
    %p108 = scmp.eq.s32.totalorder %s107, 0
    %s110 = sadd.s32 %s109, 1
    %s111 = scalar_select %p108, %s109, %s110
    %p114 = pneg %p108
    %p115 = scmp.eq.s32.totalorder %s21, 1
    %p116 = por %p114, %p115
    %p117 = scmp.ne.s32.totalorder %s109, %s112
    %p118 = scmp.eq.s32.totalorder %s21, 0
    %p119 = por %p117, %p118
    %p120 = scmp.ne.s32.totalorder %s109, %s112
    %p121 = scmp.eq.s32.totalorder %s26, 1
    %p122 = por %p120, %p121
    %p123 = scmp.ne.s32.totalorder %s112, %s113
    %p124 = scmp.eq.s32.totalorder %s26, 0
    %p125 = por %p123, %p124
    %p126 = scmp.ne.s32.totalorder %s112, %s113
    %p127 = scmp.eq.s32.totalorder %s27, 1
    %p128 = por %p126, %p127
    %p130 = scmp.ne.s32.totalorder %s113, %s129
    %p131 = scmp.eq.s32.totalorder %s27, 0
    %p132 = por %p130, %p131
    %s133 = ssub.s32 %s21, %s28
    %p134 = scmp.eq.s32.totalorder %s133, 0
    %s136 = sadd.s32 %s135, 1
    %s137 = scalar_select %p134, %s135, %s136
    %p140 = pneg %p134
    %p141 = scmp.eq.s32.totalorder %s21, 1
    %p142 = por %p140, %p141
    %p143 = scmp.ne.s32.totalorder %s135, %s138
    %p144 = scmp.eq.s32.totalorder %s21, 0
    %p145 = por %p143, %p144
    %p146 = scmp.ne.s32.totalorder %s135, %s138
    %p147 = scmp.eq.s32.totalorder %s26, 1
    %p148 = por %p146, %p147
    %p149 = scmp.ne.s32.totalorder %s138, %s139
    %p150 = scmp.eq.s32.totalorder %s26, 0
    %p151 = por %p149, %p150
    %p152 = scmp.ne.s32.totalorder %s138, %s139
    %p153 = scmp.eq.s32.totalorder %s27, 1
    %p154 = por %p152, %p153
    %p156 = scmp.ne.s32.totalorder %s139, %s155
    %p157 = scmp.eq.s32.totalorder %s27, 0
    %p158 = por %p156, %p157
    %s159 = ssub.s32 %s21, %s28
    %p160 = scmp.eq.s32.totalorder %s159, 0
    %s162 = sadd.s32 %s161, 1
    %s163 = scalar_select %p160, %s161, %s162
    %p166 = pneg %p160
    %p167 = scmp.eq.s32.totalorder %s21, 1
    %p168 = por %p166, %p167
    %p169 = scmp.ne.s32.totalorder %s161, %s164
    %p170 = scmp.eq.s32.totalorder %s21, 0
    %p171 = por %p169, %p170
    %p172 = scmp.ne.s32.totalorder %s161, %s164
    %p173 = scmp.eq.s32.totalorder %s26, 1
    %p174 = por %p172, %p173
    %p175 = scmp.ne.s32.totalorder %s164, %s165
    %p176 = scmp.eq.s32.totalorder %s26, 0
    %p177 = por %p175, %p176
    %p178 = scmp.ne.s32.totalorder %s164, %s165
    %p179 = scmp.eq.s32.totalorder %s27, 1
    %p180 = por %p178, %p179
    %p182 = scmp.ne.s32.totalorder %s165, %s181
    %p183 = scmp.eq.s32.totalorder %s27, 0
    %p184 = por %p182, %p183
    %s185 = ssub.s32 %s21, %s28
    %p186 = scmp.eq.s32.totalorder %s185, 0
    %s188 = sadd.s32 %s187, 1
    %s189 = scalar_select %p186, %s187, %s188
    %p192 = pneg %p186
    %p193 = scmp.eq.s32.totalorder %s21, 1
    %p194 = por %p192, %p193
    %p195 = scmp.ne.s32.totalorder %s187, %s190
    %p196 = scmp.eq.s32.totalorder %s21, 0
    %p197 = por %p195, %p196
    %p198 = scmp.ne.s32.totalorder %s187, %s190
    %p199 = scmp.eq.s32.totalorder %s26, 1
    %p200 = por %p198, %p199
    %p201 = scmp.ne.s32.totalorder %s190, %s191
    %p202 = scmp.eq.s32.totalorder %s26, 0
    %p203 = por %p201, %p202
    %p204 = scmp.ne.s32.totalorder %s190, %s191
    %p205 = scmp.eq.s32.totalorder %s27, 1
    %p206 = por %p204, %p205
    %p208 = scmp.ne.s32.totalorder %s191, %s207
    %p209 = scmp.eq.s32.totalorder %s27, 0
    %p210 = por %p208, %p209
    %s212 = sadd.s32 %s211, 1
    %p215 = scmp.eq.s32.totalorder %s21, 1
    %p216 = scmp.ne.s32.totalorder %s211, %s213
    %p217 = scmp.eq.s32.totalorder %s21, 0
    %p218 = por %p216, %p217
    %p219 = scmp.ne.s32.totalorder %s211, %s213
    %p220 = scmp.eq.s32.totalorder %s26, 1
    %p221 = por %p219, %p220
    %p222 = scmp.ne.s32.totalorder %s213, %s214
    %p223 = scmp.eq.s32.totalorder %s26, 0
    %p224 = por %p222, %p223
    %p225 = scmp.ne.s32.totalorder %s213, %s214
    %p226 = scmp.eq.s32.totalorder %s27, 1
    %p227 = por %p225, %p226
    %p229 = scmp.ne.s32.totalorder %s214, %s228
    %p230 = scmp.eq.s32.totalorder %s27, 0
    %p231 = por %p229, %p230
    %s233 = sadd.s32 %s232, 1
    %p236 = scmp.eq.s32.totalorder %s21, 1
    %p237 = scmp.ne.s32.totalorder %s232, %s234
    %p238 = scmp.eq.s32.totalorder %s21, 0
    %p239 = por %p237, %p238
    %p240 = scmp.ne.s32.totalorder %s232, %s234
    %p241 = scmp.eq.s32.totalorder %s26, 1
    %p242 = por %p240, %p241
    %p243 = scmp.ne.s32.totalorder %s234, %s235
    %p244 = scmp.eq.s32.totalorder %s26, 0
    %p245 = por %p243, %p244
    %p246 = scmp.ne.s32.totalorder %s234, %s235
    %p247 = scmp.eq.s32.totalorder %s27, 1
    %p248 = por %p246, %p247
    %p250 = scmp.ne.s32.totalorder %s235, %s249
    %p251 = scmp.eq.s32.totalorder %s27, 0
    %p252 = por %p250, %p251
    %s254 = sadd.s32 %s253, 1
    %p257 = scmp.eq.s32.totalorder %s21, 1
    %p258 = scmp.ne.s32.totalorder %s253, %s255
    %p259 = scmp.eq.s32.totalorder %s21, 0
    %p260 = por %p258, %p259
    %p261 = scmp.ne.s32.totalorder %s253, %s255
    %p262 = scmp.eq.s32.totalorder %s26, 1
    %p263 = por %p261, %p262
    %p264 = scmp.ne.s32.totalorder %s255, %s256
    %p265 = scmp.eq.s32.totalorder %s26, 0
    %p266 = por %p264, %p265
    %p267 = scmp.ne.s32.totalorder %s255, %s256
    %p268 = scmp.eq.s32.totalorder %s27, 1
    %p269 = por %p267, %p268
    %p271 = scmp.ne.s32.totalorder %s256, %s270
    %p272 = scmp.eq.s32.totalorder %s27, 0
    %p273 = por %p271, %p272
    %s275 = sadd.s32 %s274, 1
    %p278 = scmp.eq.s32.totalorder %s21, 1
    %p279 = scmp.ne.s32.totalorder %s274, %s276
    %p280 = scmp.eq.s32.totalorder %s21, 0
    %p281 = por %p279, %p280
    %p282 = scmp.ne.s32.totalorder %s274, %s276
    %p283 = scmp.eq.s32.totalorder %s26, 1
    %p284 = por %p282, %p283
    %p285 = scmp.ne.s32.totalorder %s276, %s277
    %p286 = scmp.eq.s32.totalorder %s26, 0
    %p287 = por %p285, %p286
    %p288 = scmp.ne.s32.totalorder %s276, %s277
    %p289 = scmp.eq.s32.totalorder %s27, 1
    %p290 = por %p288, %p289
    %p292 = scmp.ne.s32.totalorder %s277, %s291
    %p293 = scmp.eq.s32.totalorder %s27, 0
    %p294 = por %p292, %p293
    %s296 = sadd.s32 %s295, 1
    %p299 = scmp.eq.s32.totalorder %s21, 1
    %p300 = scmp.ne.s32.totalorder %s295, %s297
    %p301 = scmp.eq.s32.totalorder %s21, 0
    %p302 = por %p300, %p301
    %p303 = scmp.ne.s32.totalorder %s295, %s297
    %p304 = scmp.eq.s32.totalorder %s26, 1
    %p305 = por %p303, %p304
    %p306 = scmp.ne.s32.totalorder %s297, %s298
    %p307 = scmp.eq.s32.totalorder %s26, 0
    %p308 = por %p306, %p307
    %p309 = scmp.ne.s32.totalorder %s297, %s298
    %p310 = scmp.eq.s32.totalorder %s27, 1
    %p311 = por %p309, %p310
    %p313 = scmp.ne.s32.totalorder %s298, %s312
    %p314 = scmp.eq.s32.totalorder %s27, 0
    %p315 = por %p313, %p314
    %s317 = sadd.s32 %s316, 1
    %p320 = scmp.eq.s32.totalorder %s21, 1
    %p321 = scmp.ne.s32.totalorder %s316, %s318
    %p322 = scmp.eq.s32.totalorder %s21, 0
    %p323 = por %p321, %p322
    %p324 = scmp.ne.s32.totalorder %s316, %s318
    %p325 = scmp.eq.s32.totalorder %s26, 1
    %p326 = por %p324, %p325
    %p327 = scmp.ne.s32.totalorder %s318, %s319
    %p328 = scmp.eq.s32.totalorder %s26, 0
    %p329 = por %p327, %p328
    %p330 = scmp.ne.s32.totalorder %s318, %s319
    %p331 = scmp.eq.s32.totalorder %s27, 1
    %p332 = por %p330, %p331
    %p334 = scmp.ne.s32.totalorder %s319, %s333
    %p335 = scmp.eq.s32.totalorder %s27, 0
    %p336 = por %p334, %p335
    %s338 = sadd.s32 %s337, 1
    %p341 = scmp.eq.s32.totalorder %s21, 1
    %p342 = scmp.ne.s32.totalorder %s337, %s339
    %p343 = scmp.eq.s32.totalorder %s21, 0
    %p344 = por %p342, %p343
    %p345 = scmp.ne.s32.totalorder %s337, %s339
    %p346 = scmp.eq.s32.totalorder %s26, 1
    %p347 = por %p345, %p346
    %p348 = scmp.ne.s32.totalorder %s339, %s340
    %p349 = scmp.eq.s32.totalorder %s26, 0
    %p350 = por %p348, %p349
    %p351 = scmp.ne.s32.totalorder %s339, %s340
    %p352 = scmp.eq.s32.totalorder %s27, 1
    %p353 = por %p351, %p352
    %p355 = scmp.ne.s32.totalorder %s340, %s354
    %p356 = scmp.eq.s32.totalorder %s27, 0
    %p357 = por %p355, %p356
    %s359 = sadd.s32 %s358, 1
    %p362 = scmp.eq.s32.totalorder %s21, 1
    %p363 = scmp.ne.s32.totalorder %s358, %s360
    %p364 = scmp.eq.s32.totalorder %s21, 0
    %p365 = por %p363, %p364
    %p366 = scmp.ne.s32.totalorder %s358, %s360
    %p367 = scmp.eq.s32.totalorder %s26, 1
    %p368 = por %p366, %p367
    %p369 = scmp.ne.s32.totalorder %s360, %s361
    %p370 = scmp.eq.s32.totalorder %s26, 0
    %p371 = por %p369, %p370
    %p372 = scmp.ne.s32.totalorder %s360, %s361
    %p373 = scmp.eq.s32.totalorder %s27, 1
    %p374 = por %p372, %p373
    %p376 = scmp.ne.s32.totalorder %s361, %s375
    %p377 = scmp.eq.s32.totalorder %s27, 0
    %p378 = por %p376, %p377
    %s379 = ssub.s32 %s21, %s28
    %p380 = scmp.eq.s32.totalorder %s379, 0
    %s382 = sadd.s32 %s381, 1
    %s383 = scalar_select %p380, %s381, %s382
    %p386 = pneg %p380
    %p387 = scmp.eq.s32.totalorder %s21, 1
    %p388 = por %p386, %p387
    %p389 = scmp.ne.s32.totalorder %s381, %s384
    %p390 = scmp.eq.s32.totalorder %s21, 0
    %p391 = por %p389, %p390
    %p392 = scmp.ne.s32.totalorder %s381, %s384
    %p393 = scmp.eq.s32.totalorder %s26, 1
    %p394 = por %p392, %p393
    %p395 = scmp.ne.s32.totalorder %s384, %s385
    %p396 = scmp.eq.s32.totalorder %s26, 0
    %p397 = por %p395, %p396
    %p398 = scmp.ne.s32.totalorder %s384, %s385
    %p399 = scmp.eq.s32.totalorder %s27, 1
    %p400 = por %p398, %p399
    %p402 = scmp.ne.s32.totalorder %s385, %s401
    %p403 = scmp.eq.s32.totalorder %s27, 0
    %p404 = por %p402, %p403
    %p405 = scmp.le.s32.totalorder 1, %s21
    %p406 = scmp.lt.s32.totalorder %s21, 3
    %p407 = pnand %p405, %p406
    %p408 = pneg %p407
    // Predicated region
    $region9: #{tpu_custom_call.1} parent=5 // pred_check
      _
    $region10: #{tpu_custom_call.1} parent=5 // pred_check_branch
      %410 = sbr.rel (%p407) target = $region12
    $region11: #{tpu_custom_call.1} parent=5 // pred_region
      %s411 = ssub.s32 %s21, 1
      // Predicated region
      $region13: #{tpu_custom_call.1} parent=11 // pred_check
        %p412 = pneg %p224
      $region14: #{tpu_custom_call.1} parent=11 // pred_check_branch
        %414 = sbr.rel (%p412) target = $region16
      $region15: #{tpu_custom_call.1} parent=11 // pred_region
        _
      $region16: #{tpu_custom_call.1} parent=11 // pred_fallthru
        _
      // Predicated region
      $region17: #{tpu_custom_call.1} parent=11 // pred_check
        %p415 = pneg %p245
      $region18: #{tpu_custom_call.1} parent=11 // pred_check_branch
        %417 = sbr.rel (%p415) target = $region20
      $region19: #{tpu_custom_call.1} parent=11 // pred_region
        _
      $region20: #{tpu_custom_call.1} parent=11 // pred_fallthru
        _
      // Predicated region
      $region21: #{tpu_custom_call.1} parent=11 // pred_check
        %p418 = pneg %p266
      $region22: #{tpu_custom_call.1} parent=11 // pred_check_branch
        %420 = sbr.rel (%p418) target = $region24
      $region23: #{tpu_custom_call.1} parent=11 // pred_region
        _
      $region24: #{tpu_custom_call.1} parent=11 // pred_fallthru
        _
      // Predicated region
      $region25: #{tpu_custom_call.1} parent=11 // pred_check
        %p421 = pneg %p287
      $region26: #{tpu_custom_call.1} parent=11 // pred_check_branch
        %423 = sbr.rel (%p421) target = $region28
      $region27: #{tpu_custom_call.1} parent=11 // pred_region
        _
      $region28: #{tpu_custom_call.1} parent=11 // pred_fallthru
        _
      // Predicated region
      $region29: #{tpu_custom_call.1} parent=11 // pred_check
        %p424 = pneg %p308
      $region30: #{tpu_custom_call.1} parent=11 // pred_check_branch
        %426 = sbr.rel (%p424) target = $region32
      $region31: #{tpu_custom_call.1} parent=11 // pred_region
        _
      $region32: #{tpu_custom_call.1} parent=11 // pred_fallthru
        _
      // Predicated region
      $region33: #{tpu_custom_call.1} parent=11 // pred_check
        %p427 = pneg %p329
      $region34: #{tpu_custom_call.1} parent=11 // pred_check_branch
        %429 = sbr.rel (%p427) target = $region36
      $region35: #{tpu_custom_call.1} parent=11 // pred_region
        _
      $region36: #{tpu_custom_call.1} parent=11 // pred_fallthru
        _
      // Predicated region
      $region37: #{tpu_custom_call.1} parent=11 // pred_check
        %p430 = pneg %p350
      $region38: #{tpu_custom_call.1} parent=11 // pred_check_branch
        %432 = sbr.rel (%p430) target = $region40
      $region39: #{tpu_custom_call.1} parent=11 // pred_region
        _
      $region40: #{tpu_custom_call.1} parent=11 // pred_fallthru
        _
      // Predicated region
      $region41: #{tpu_custom_call.1} parent=11 // pred_check
        %p433 = pneg %p371
      $region42: #{tpu_custom_call.1} parent=11 // pred_check_branch
        %435 = sbr.rel (%p433) target = $region44
      $region43: #{tpu_custom_call.1} parent=11 // pred_region
        _
      $region44: #{tpu_custom_call.1} parent=11 // pred_fallthru
        _
    $region12: #{tpu_custom_call.1} parent=5 // pred_fallthru
      _
    %p436 = scmp.lt.s32.totalorder %s21, 2
    // Predicated region
    $region45: #{tpu_custom_call.1} parent=5 // pred_check
      %p437 = pneg %p436
    $region46: #{tpu_custom_call.1} parent=5 // pred_check_branch
      %439 = sbr.rel (%p437) target = $region48
    $region47: #{tpu_custom_call.1} parent=5 // pred_region
      // Predicated region
      $region49: #{tpu_custom_call.1} parent=47 // pred_check
        %p440 = pneg %p41
      $region50: #{tpu_custom_call.1} parent=47 // pred_check_branch
        %442 = sbr.rel (%p440) target = $region52
      $region51: #{tpu_custom_call.1} parent=47 // pred_region
        %s443 = smul.u32 16, %s21
        %p444 = scmp.lt.s32.totalorder %s443, 31
        %s445 = scalar_select %p444, %s443, 31
        %s446 = smul.addr %s445, 4
        %s447 = scalar_lea.vmem %s0, %s446
        %s448 = smul.u32 16, %s21
      $region52: #{tpu_custom_call.1} parent=47 // pred_fallthru
        _
      // Predicated region
      $region53: #{tpu_custom_call.1} parent=47 // pred_check
        %p449 = pneg %p67
      $region54: #{tpu_custom_call.1} parent=47 // pred_check_branch
        %451 = sbr.rel (%p449) target = $region56
      $region55: #{tpu_custom_call.1} parent=47 // pred_region
        %s452 = smul.u32 16, %s21
        %p453 = scmp.lt.s32.totalorder %s452, 31
        %s454 = scalar_select %p453, %s452, 31
        %s455 = smul.addr %s454, 3
        %s456 = smul.addr %s455, 4
        %s457 = scalar_lea.vmem %s1, %s456
        %s458 = smul.u32 16, %s21
      $region56: #{tpu_custom_call.1} parent=47 // pred_fallthru
        _
      // Predicated region
      $region57: #{tpu_custom_call.1} parent=47 // pred_check
        %p459 = pneg %p93
      $region58: #{tpu_custom_call.1} parent=47 // pred_check_branch
        %461 = sbr.rel (%p459) target = $region60
      $region59: #{tpu_custom_call.1} parent=47 // pred_region
        %s462 = smul.u32 16, %s21
        %p463 = scmp.lt.s32.totalorder %s462, 31
        %s464 = scalar_select %p463, %s462, 31
        %s465 = smul.addr %s464, 4
        %s466 = scalar_lea.vmem %s2, %s465
        %s467 = smul.u32 16, %s21
      $region60: #{tpu_custom_call.1} parent=47 // pred_fallthru
        _
      // Predicated region
      $region61: #{tpu_custom_call.1} parent=47 // pred_check
        %p468 = pneg %p119
      $region62: #{tpu_custom_call.1} parent=47 // pred_check_branch
        %470 = sbr.rel (%p468) target = $region64
      $region63: #{tpu_custom_call.1} parent=47 // pred_region
        %s471 = smul.u32 16, %s21
        %p472 = scmp.lt.s32.totalorder %s471, 31
        %s473 = scalar_select %p472, %s471, 31
        %s474 = smul.addr %s473, 4
        %s475 = scalar_lea.vmem %s3, %s474
        %s476 = smul.u32 16, %s21
      $region64: #{tpu_custom_call.1} parent=47 // pred_fallthru
        _
      // Predicated region
      $region65: #{tpu_custom_call.1} parent=47 // pred_check
        %p477 = pneg %p145
      $region66: #{tpu_custom_call.1} parent=47 // pred_check_branch
        %479 = sbr.rel (%p477) target = $region68
      $region67: #{tpu_custom_call.1} parent=47 // pred_region
        %s480 = smul.u32 16, %s21
        %p481 = scmp.lt.s32.totalorder %s480, 31
        %s482 = scalar_select %p481, %s480, 31
        %s483 = smul.addr %s482, 3
        %s484 = smul.addr %s483, 4
        %s485 = scalar_lea.vmem %s4, %s484
        %s486 = smul.u32 16, %s21
      $region68: #{tpu_custom_call.1} parent=47 // pred_fallthru
        _
      // Predicated region
      $region69: #{tpu_custom_call.1} parent=47 // pred_check
        %p487 = pneg %p171
      $region70: #{tpu_custom_call.1} parent=47 // pred_check_branch
        %489 = sbr.rel (%p487) target = $region72
      $region71: #{tpu_custom_call.1} parent=47 // pred_region
        %s490 = smul.u32 16, %s21
        %p491 = scmp.lt.s32.totalorder %s490, 31
        %s492 = scalar_select %p491, %s490, 31
        %s493 = smul.addr %s492, 4
        %s494 = scalar_lea.vmem %s5, %s493
        %s495 = smul.u32 16, %s21
      $region72: #{tpu_custom_call.1} parent=47 // pred_fallthru
        _
      // Predicated region
      $region73: #{tpu_custom_call.1} parent=47 // pred_check
        %p496 = pneg %p197
      $region74: #{tpu_custom_call.1} parent=47 // pred_check_branch
        %498 = sbr.rel (%p496) target = $region76
      $region75: #{tpu_custom_call.1} parent=47 // pred_region
        %s499 = smul.u32 16, %s21
        %p500 = scmp.lt.s32.totalorder %s499, 31
        %s501 = scalar_select %p500, %s499, 31
        %s502 = smul.addr %s501, 4
        %s503 = scalar_lea.vmem %s6, %s502
        %s504 = smul.u32 16, %s21
      $region76: #{tpu_custom_call.1} parent=47 // pred_fallthru
        _
    $region48: #{tpu_custom_call.1} parent=5 // pred_fallthru
      _
    %p505 = scmp.le.s32.totalorder 1, %s21
    %p506 = scmp.lt.s32.totalorder %s21, 3
    %p507 = pnand %p505, %p506
    %p508 = pneg %p507
    // Predicated region
    $region77: #{tpu_custom_call.1} parent=5 // pred_check
      _
    $region78: #{tpu_custom_call.1} parent=5 // pred_check_branch
      %510 = sbr.rel (%p507) target = $region80
    $region79: #{tpu_custom_call.1} parent=5 // pred_region
      %s511 = ssub.s32 %s21, 1
      %s512 = smul.u32 16, %s26
      %p513 = scmp.lt.s32.totalorder %s512, 31
      %s514 = scalar_select %p513, %s512, 31
      %s515 = smul.addr %s514, 4
      %s516 = scalar_lea.vmem %s0, %s515
      %p517 = pneg %p47
      %p518 = pneg %p44
      %s519 = smul.u32 16, %s26
      %p520 = scmp.lt.s32.totalorder %s519, 31
      %s521 = scalar_select %p520, %s519, 31
      %s522 = smul.addr %s521, 3
      %s523 = smul.addr %s522, 4
      %s524 = scalar_lea.vmem %s1, %s523
      %p525 = pneg %p73
      %p526 = pneg %p70
      %s527 = smul.u32 16, %s26
      %p528 = scmp.lt.s32.totalorder %s527, 31
      %s529 = scalar_select %p528, %s527, 31
      %s530 = smul.addr %s529, 4
      %s531 = scalar_lea.vmem %s2, %s530
      %p532 = pneg %p99
      %p533 = pneg %p96
      %s534 = smul.u32 16, %s26
      %p535 = scmp.lt.s32.totalorder %s534, 31
      %s536 = scalar_select %p535, %s534, 31
      %s537 = smul.addr %s536, 4
      %s538 = scalar_lea.vmem %s3, %s537
      %p539 = pneg %p125
      %p540 = pneg %p122
      %s541 = smul.u32 16, %s26
      %p542 = scmp.lt.s32.totalorder %s541, 31
      %s543 = scalar_select %p542, %s541, 31
      %s544 = smul.addr %s543, 3
      %s545 = smul.addr %s544, 4
      %s546 = scalar_lea.vmem %s4, %s545
      %p547 = pneg %p151
      %p548 = pneg %p148
      %s549 = smul.u32 16, %s26
      %p550 = scmp.lt.s32.totalorder %s549, 31
      %s551 = scalar_select %p550, %s549, 31
      %s552 = smul.addr %s551, 4
      %s553 = scalar_lea.vmem %s5, %s552
      %p554 = pneg %p177
      %p555 = pneg %p174
      %s556 = smul.u32 16, %s26
      %p557 = scmp.lt.s32.totalorder %s556, 31
      %s558 = scalar_select %p557, %s556, 31
      %s559 = smul.addr %s558, 4
      %s560 = scalar_lea.vmem %s6, %s559
      %p561 = pneg %p203
      %p562 = pneg %p200
      %p563 = pneg %p224
      %p564 = pneg %p221
      %p565 = pneg %p245
      %p566 = pneg %p242
      %p567 = pneg %p266
      %p568 = pneg %p263
      %p569 = pneg %p287
      %p570 = pneg %p284
      %p571 = pneg %p308
      %p572 = pneg %p305
      %p573 = pneg %p329
      %p574 = pneg %p326
      %p575 = pneg %p350
      %p576 = pneg %p347
      %p577 = pneg %p371
      %p578 = pneg %p368
      %p579 = pneg %p397
      %p580 = pneg %p394
      %s581 = smul.u32 16, %s26
      %p582 = scmp.lt.s32.totalorder %s581, 31
      %s583 = scalar_select %p582, %s581, 31
      %s584 = smul.addr %s583, 8
      %s585 = scalar_lea.vmem %s15, %s584
      %s586 = smul.u32 16, %s26
      %p587 = scmp.lt.s32.totalorder %s586, 31
      %s588 = scalar_select %p587, %s586, 31
      %s589 = smul.addr %s588, 4
      %s590 = scalar_lea.vmem %s0, %s589
      %s591 = smul.u32 16, %s26
      %s592 = smul.u32 16, %s26
      %p593 = scmp.lt.s32.totalorder %s592, 31
      %s594 = scalar_select %p593, %s592, 31
      %s595 = smul.addr %s594, 3
      %s596 = smul.addr %s595, 4
      %s597 = scalar_lea.vmem %s1, %s596
      %s598 = smul.u32 16, %s26
      %s599 = smul.u32 16, %s26
      %p600 = scmp.lt.s32.totalorder %s599, 31
      %s601 = scalar_select %p600, %s599, 31
      %s602 = smul.addr %s601, 4
      %s603 = scalar_lea.vmem %s2, %s602
      %s604 = smul.u32 16, %s26
      %s605 = smul.u32 16, %s26
      %p606 = scmp.lt.s32.totalorder %s605, 31
      %s607 = scalar_select %p606, %s605, 31
      %s608 = smul.addr %s607, 4
      %s609 = scalar_lea.vmem %s3, %s608
      %s610 = smul.u32 16, %s26
      %s611 = smul.u32 16, %s26
      %p612 = scmp.lt.s32.totalorder %s611, 31
      %s613 = scalar_select %p612, %s611, 31
      %s614 = smul.addr %s613, 3
      %s615 = smul.addr %s614, 4
      %s616 = scalar_lea.vmem %s4, %s615
      %s617 = smul.u32 16, %s26
      %s618 = smul.u32 16, %s26
      %p619 = scmp.lt.s32.totalorder %s618, 31
      %s620 = scalar_select %p619, %s618, 31
      %s621 = smul.addr %s620, 4
      %s622 = scalar_lea.vmem %s5, %s621
      %s623 = smul.u32 16, %s26
      %s624 = smul.u32 16, %s26
      %p625 = scmp.lt.s32.totalorder %s624, 31
      %s626 = scalar_select %p625, %s624, 31
      %s627 = smul.addr %s626, 4
      %s628 = scalar_lea.vmem %s6, %s627
      %s629 = smul.u32 16, %s26
      %s630 = smul.u32 16, %s26
      %p631 = scmp.lt.s32.totalorder %s630, 31
      %s632 = scalar_select %p631, %s630, 31
      %s633 = smul.addr %s632, 8
      %s634 = scalar_lea.vmem %s15, %s633
      %s635 = smul.u32 16, %s26
      %v637 = vld [vmem:[%s597] sm:$0xff]
      %v638 = vld [vmem:[%s597 + $0x8] sm:$0xf]
      %v639 = vld [vmem:[%s597 + $0xc] sm:$0xff]
      %v640 = vld [vmem:[%s597 + $0x14] sm:$0xf]
      %v641 = vld [vmem:[%s597 + $0x18] sm:$0xff]
      %v642 = vld [vmem:[%s597 + $0x20] sm:$0xf]
      %v643 = vld [vmem:[%s597 + $0x24] sm:$0xff]
      %v644 = vld [vmem:[%s597 + $0x2c] sm:$0xf]
      %v645 = vld [vmem:[%s597 + $0x30] sm:$0xff]
      %v646 = vld [vmem:[%s597 + $0x38] sm:$0xf]
      %v647 = vld [vmem:[%s597 + $0x3c] sm:$0xff]
      %v648 = vld [vmem:[%s597 + $0x44] sm:$0xf]
      %v649 = vld [vmem:[%s597 + $0x48] sm:$0xff]
      %v650 = vld [vmem:[%s597 + $0x50] sm:$0xf]
      %v651 = vld [vmem:[%s597 + $0x54] sm:$0xff]
      %v652 = vld [vmem:[%s597 + $0x5c] sm:$0xf]
      %v653 = vld [vmem:[%s597 + $0x60] sm:$0xff]
      %v654 = vld [vmem:[%s597 + $0x68] sm:$0xf]
      %v655 = vld [vmem:[%s597 + $0x6c] sm:$0xff]
      %v656 = vld [vmem:[%s597 + $0x74] sm:$0xf]
      %v657 = vld [vmem:[%s597 + $0x78] sm:$0xff]
      %v658 = vld [vmem:[%s597 + $0x80] sm:$0xf]
      %v659 = vld [vmem:[%s597 + $0x84] sm:$0xff]
      %v660 = vld [vmem:[%s597 + $0x8c] sm:$0xf]
      %v661 = vld [vmem:[%s597 + $0x90] sm:$0xff]
      %v662 = vld [vmem:[%s597 + $0x98] sm:$0xf]
      %v663 = vld [vmem:[%s597 + $0x9c] sm:$0xff]
      %v664 = vld [vmem:[%s597 + $0xa4] sm:$0xf]
      %v665 = vld [vmem:[%s597 + $0xa8] sm:$0xff]
      %v666 = vld [vmem:[%s597 + $0xb0] sm:$0xf]
      %v667 = vld [vmem:[%s597 + $0xb4] sm:$0xff]
      %v668 = vld [vmem:[%s597 + $0xbc] sm:$0xf]
      %v669 = vld [vmem:[%s8] sm:$0xf]
      %v670 = vld [vmem:[%s8 + $0x4] sm:$0xf]
      %v671 = vld [vmem:[%s8 + $0x8] sm:$0xf]
      %v672 = vld [vmem:[%s8 + $0xc] sm:$0xf]
      %v673 = vld [vmem:[%s8 + $0x10] sm:$0xf]
      %v674 = vld [vmem:[%s8 + $0x14] sm:$0xf]
      %v675 = vld [vmem:[%s8 + $0x18] sm:$0xf]
      %v676 = vld [vmem:[%s8 + $0x1c] sm:$0xf]
      %v677 = vld [vmem:[%s8 + $0x20] sm:$0xf]
      %v678 = vld [vmem:[%s8 + $0x24] sm:$0xf]
      %v679 = vld [vmem:[%s8 + $0x28] sm:$0xf]
      %v680 = vld [vmem:[%s8 + $0x2c] sm:$0xf]
      %v681 = vld [vmem:[%s8 + $0x30] sm:$0xf]
      %v682 = vld [vmem:[%s8 + $0x34] sm:$0xf]
      %v683 = vld [vmem:[%s8 + $0x38] sm:$0xf]
      %v684 = vld [vmem:[%s8 + $0x3c] sm:$0xf]
      %v685 = vld [vmem:[%s8 + $0x40] sm:$0xf]
      %v686 = vld [vmem:[%s8 + $0x44] sm:$0xf]
      %v687 = vld [vmem:[%s8 + $0x48] sm:$0xf]
      %v688 = vld [vmem:[%s8 + $0x4c] sm:$0xf]
      %v689 = vld [vmem:[%s8 + $0x50] sm:$0xf]
      %v690 = vld [vmem:[%s8 + $0x54] sm:$0xf]
      %v691 = vld [vmem:[%s8 + $0x58] sm:$0xf]
      %v692 = vld [vmem:[%s8 + $0x5c] sm:$0xf]
      %v693 = vld [vmem:[%s8 + $0x60] sm:$0xf]
      %v694 = vld [vmem:[%s8 + $0x64] sm:$0xf]
      %v695 = vld [vmem:[%s8 + $0x68] sm:$0xf]
      %v696 = vld [vmem:[%s8 + $0x6c] sm:$0xf]
      %v697 = vld [vmem:[%s8 + $0x70] sm:$0xf]
      %v698 = vld [vmem:[%s8 + $0x74] sm:$0xf]
      %v699 = vld [vmem:[%s8 + $0x78] sm:$0xf]
      %v700 = vld [vmem:[%s8 + $0x7c] sm:$0xf]
      %v701 = vld [vmem:[%s8 + $0x80] sm:$0xf]
      %v702 = vld [vmem:[%s8 + $0x84] sm:$0xf]
      %v703 = vld [vmem:[%s8 + $0x88] sm:$0xf]
      %v704 = vld [vmem:[%s8 + $0x8c] sm:$0xf]
      %v705 = vld [vmem:[%s8 + $0x90] sm:$0xf]
      %v706 = vld [vmem:[%s8 + $0x94] sm:$0xf]
      %v707 = vld [vmem:[%s8 + $0x98] sm:$0xf]
      %v708 = vld [vmem:[%s8 + $0x9c] sm:$0xf]
      %v709 = vld [vmem:[%s8 + $0xa0] sm:$0xf]
      %v710 = vld [vmem:[%s8 + $0xa4] sm:$0xf]
      %v711 = vld [vmem:[%s8 + $0xa8] sm:$0xf]
      %v712 = vld [vmem:[%s8 + $0xac] sm:$0xf]
      %v713 = vld [vmem:[%s8 + $0xb0] sm:$0xf]
      %v714 = vld [vmem:[%s8 + $0xb4] sm:$0xf]
      %v715 = vld [vmem:[%s8 + $0xb8] sm:$0xf]
      %v716 = vld [vmem:[%s8 + $0xbc] sm:$0xf]
      %v717 = vld [vmem:[%s616] sm:$0xff]
      %v718 = vld [vmem:[%s616 + $0x8] sm:$0xf]
      %v719 = vld [vmem:[%s616 + $0xc] sm:$0xff]
      %v720 = vld [vmem:[%s616 + $0x14] sm:$0xf]
      %v721 = vld [vmem:[%s616 + $0x18] sm:$0xff]
      %v722 = vld [vmem:[%s616 + $0x20] sm:$0xf]
      %v723 = vld [vmem:[%s616 + $0x24] sm:$0xff]
      %v724 = vld [vmem:[%s616 + $0x2c] sm:$0xf]
      %v725 = vld [vmem:[%s616 + $0x30] sm:$0xff]
      %v726 = vld [vmem:[%s616 + $0x38] sm:$0xf]
      %v727 = vld [vmem:[%s616 + $0x3c] sm:$0xff]
      %v728 = vld [vmem:[%s616 + $0x44] sm:$0xf]
      %v729 = vld [vmem:[%s616 + $0x48] sm:$0xff]
      %v730 = vld [vmem:[%s616 + $0x50] sm:$0xf]
      %v731 = vld [vmem:[%s616 + $0x54] sm:$0xff]
      %v732 = vld [vmem:[%s616 + $0x5c] sm:$0xf]
      %v733 = vld [vmem:[%s616 + $0x60] sm:$0xff]
      %v734 = vld [vmem:[%s616 + $0x68] sm:$0xf]
      %v735 = vld [vmem:[%s616 + $0x6c] sm:$0xff]
      %v736 = vld [vmem:[%s616 + $0x74] sm:$0xf]
      %v737 = vld [vmem:[%s616 + $0x78] sm:$0xff]
      %v738 = vld [vmem:[%s616 + $0x80] sm:$0xf]
      %v739 = vld [vmem:[%s616 + $0x84] sm:$0xff]
      %v740 = vld [vmem:[%s616 + $0x8c] sm:$0xf]
      %v741 = vld [vmem:[%s616 + $0x90] sm:$0xff]
      %v742 = vld [vmem:[%s616 + $0x98] sm:$0xf]
      %v743 = vld [vmem:[%s616 + $0x9c] sm:$0xff]
      %v744 = vld [vmem:[%s616 + $0xa4] sm:$0xf]
      %v745 = vld [vmem:[%s616 + $0xa8] sm:$0xff]
      %v746 = vld [vmem:[%s616 + $0xb0] sm:$0xf]
      %v747 = vld [vmem:[%s616 + $0xb4] sm:$0xff]
      %v748 = vld [vmem:[%s616 + $0xbc] sm:$0xf]
      %v749 = vld [vmem:[%s11] sm:$0xf]
      %v750 = vld [vmem:[%s11 + $0x4] sm:$0xf]
      %v751 = vld [vmem:[%s11 + $0x8] sm:$0xf]
      %v752 = vld [vmem:[%s11 + $0xc] sm:$0xf]
      %v753 = vld [vmem:[%s11 + $0x10] sm:$0xf]
      %v754 = vld [vmem:[%s11 + $0x14] sm:$0xf]
      %v755 = vld [vmem:[%s11 + $0x18] sm:$0xf]
      %v756 = vld [vmem:[%s11 + $0x1c] sm:$0xf]
      %v757 = vld [vmem:[%s11 + $0x20] sm:$0xf]
      %v758 = vld [vmem:[%s11 + $0x24] sm:$0xf]
      %v759 = vld [vmem:[%s11 + $0x28] sm:$0xf]
      %v760 = vld [vmem:[%s11 + $0x2c] sm:$0xf]
      %v761 = vld [vmem:[%s11 + $0x30] sm:$0xf]
      %v762 = vld [vmem:[%s11 + $0x34] sm:$0xf]
      %v763 = vld [vmem:[%s11 + $0x38] sm:$0xf]
      %v764 = vld [vmem:[%s11 + $0x3c] sm:$0xf]
      %v765 = vld [vmem:[%s11 + $0x40] sm:$0xf]
      %v766 = vld [vmem:[%s11 + $0x44] sm:$0xf]
      %v767 = vld [vmem:[%s11 + $0x48] sm:$0xf]
      %v768 = vld [vmem:[%s11 + $0x4c] sm:$0xf]
      %v769 = vld [vmem:[%s11 + $0x50] sm:$0xf]
      %v770 = vld [vmem:[%s11 + $0x54] sm:$0xf]
      %v771 = vld [vmem:[%s11 + $0x58] sm:$0xf]
      %v772 = vld [vmem:[%s11 + $0x5c] sm:$0xf]
      %v773 = vld [vmem:[%s11 + $0x60] sm:$0xf]
      %v774 = vld [vmem:[%s11 + $0x64] sm:$0xf]
      %v775 = vld [vmem:[%s11 + $0x68] sm:$0xf]
      %v776 = vld [vmem:[%s11 + $0x6c] sm:$0xf]
      %v777 = vld [vmem:[%s11 + $0x70] sm:$0xf]
      %v778 = vld [vmem:[%s11 + $0x74] sm:$0xf]
      %v779 = vld [vmem:[%s11 + $0x78] sm:$0xf]
      %v780 = vld [vmem:[%s11 + $0x7c] sm:$0xf]
      %v781 = vld [vmem:[%s11 + $0x80] sm:$0xf]
      %v782 = vld [vmem:[%s11 + $0x84] sm:$0xf]
      %v783 = vld [vmem:[%s11 + $0x88] sm:$0xf]
      %v784 = vld [vmem:[%s11 + $0x8c] sm:$0xf]
      %v785 = vld [vmem:[%s11 + $0x90] sm:$0xf]
      %v786 = vld [vmem:[%s11 + $0x94] sm:$0xf]
      %v787 = vld [vmem:[%s11 + $0x98] sm:$0xf]
      %v788 = vld [vmem:[%s11 + $0x9c] sm:$0xf]
      %v789 = vld [vmem:[%s11 + $0xa0] sm:$0xf]
      %v790 = vld [vmem:[%s11 + $0xa4] sm:$0xf]
      %v791 = vld [vmem:[%s11 + $0xa8] sm:$0xf]
      %v792 = vld [vmem:[%s11 + $0xac] sm:$0xf]
      %v793 = vld [vmem:[%s11 + $0xb0] sm:$0xf]
      %v794 = vld [vmem:[%s11 + $0xb4] sm:$0xf]
      %v795 = vld [vmem:[%s11 + $0xb8] sm:$0xf]
      %v796 = vld [vmem:[%s11 + $0xbc] sm:$0xf]
      %v829 = vunpack.c.l.b16 %v717
      %v830 = vunpack.c.h.b16 %v717
      %v831 = vunpack.c.l.b16 %v718
      %v832 = vunpack.c.l.b16 %v719
      %v833 = vunpack.c.h.b16 %v719
      %v834 = vunpack.c.l.b16 %v720
      %v835 = vunpack.c.l.b16 %v721
      %v836 = vunpack.c.h.b16 %v721
      %v837 = vunpack.c.l.b16 %v722
      %v838 = vunpack.c.l.b16 %v723
      %v839 = vunpack.c.h.b16 %v723
      %v840 = vunpack.c.l.b16 %v724
      %v841 = vunpack.c.l.b16 %v725
      %v842 = vunpack.c.h.b16 %v725
      %v843 = vunpack.c.l.b16 %v726
      %v844 = vunpack.c.l.b16 %v727
      %v845 = vunpack.c.h.b16 %v727
      %v846 = vunpack.c.l.b16 %v728
      %v847 = vunpack.c.l.b16 %v729
      %v848 = vunpack.c.h.b16 %v729
      %v849 = vunpack.c.l.b16 %v730
      %v850 = vunpack.c.l.b16 %v731
      %v851 = vunpack.c.h.b16 %v731
      %v852 = vunpack.c.l.b16 %v732
      %v853 = vunpack.c.l.b16 %v733
      %v854 = vunpack.c.h.b16 %v733
      %v855 = vunpack.c.l.b16 %v734
      %v856 = vunpack.c.l.b16 %v735
      %v857 = vunpack.c.h.b16 %v735
      %v858 = vunpack.c.l.b16 %v736
      %v859 = vunpack.c.l.b16 %v737
      %v860 = vunpack.c.h.b16 %v737
      %v861 = vunpack.c.l.b16 %v738
      %v862 = vunpack.c.l.b16 %v739
      %v863 = vunpack.c.h.b16 %v739
      %v864 = vunpack.c.l.b16 %v740
      %v865 = vunpack.c.l.b16 %v741
      %v866 = vunpack.c.h.b16 %v741
      %v867 = vunpack.c.l.b16 %v742
      %v868 = vunpack.c.l.b16 %v743
      %v869 = vunpack.c.h.b16 %v743
      %v870 = vunpack.c.l.b16 %v744
      %v871 = vunpack.c.l.b16 %v745
      %v872 = vunpack.c.h.b16 %v745
      %v873 = vunpack.c.l.b16 %v746
      %v874 = vunpack.c.l.b16 %v747
      %v875 = vunpack.c.h.b16 %v747
      %v876 = vunpack.c.l.b16 %v748
      %v877 = vpack.c.b16 %v832, %v829
      %v878 = vpack.c.b16 %v833, %v830
      %v879 = vpack.c.b16 %v834, %v831
      %v880 = vpack.c.b16 %v838, %v835
      %v881 = vpack.c.b16 %v839, %v836
      %v882 = vpack.c.b16 %v840, %v837
      %v883 = vpack.c.b16 %v844, %v841
      %v884 = vpack.c.b16 %v845, %v842
      %v885 = vpack.c.b16 %v846, %v843
      %v886 = vpack.c.b16 %v850, %v847
      %v887 = vpack.c.b16 %v851, %v848
      %v888 = vpack.c.b16 %v852, %v849
      %v889 = vpack.c.b16 %v856, %v853
      %v890 = vpack.c.b16 %v857, %v854
      %v891 = vpack.c.b16 %v858, %v855
      %v892 = vpack.c.b16 %v862, %v859
      %v893 = vpack.c.b16 %v863, %v860
      %v894 = vpack.c.b16 %v864, %v861
      %v895 = vpack.c.b16 %v868, %v865
      %v896 = vpack.c.b16 %v869, %v866
      %v897 = vpack.c.b16 %v870, %v867
      %v898 = vpack.c.b16 %v874, %v871
      %v899 = vpack.c.b16 %v875, %v872
      %v900 = vpack.c.b16 %v876, %v873
      %v965 = vunpack.c.l.b16 %v749
      %v966 = vunpack.c.l.b16 %v750
      %v967 = vunpack.c.l.b16 %v751
      %v968 = vunpack.c.l.b16 %v752
      %v969 = vunpack.c.l.b16 %v753
      %v970 = vunpack.c.l.b16 %v754
      %v971 = vunpack.c.l.b16 %v755
      %v972 = vunpack.c.l.b16 %v756
      %v973 = vunpack.c.l.b16 %v757
      %v974 = vunpack.c.l.b16 %v758
      %v975 = vunpack.c.l.b16 %v759
      %v976 = vunpack.c.l.b16 %v760
      %v977 = vunpack.c.l.b16 %v761
      %v978 = vunpack.c.l.b16 %v762
      %v979 = vunpack.c.l.b16 %v763
      %v980 = vunpack.c.l.b16 %v764
      %v981 = vunpack.c.l.b16 %v765
      %v982 = vunpack.c.l.b16 %v766
      %v983 = vunpack.c.l.b16 %v767
      %v984 = vunpack.c.l.b16 %v768
      %v985 = vunpack.c.l.b16 %v769
      %v986 = vunpack.c.l.b16 %v770
      %v987 = vunpack.c.l.b16 %v771
      %v988 = vunpack.c.l.b16 %v772
      %v989 = vunpack.c.l.b16 %v773
      %v990 = vunpack.c.l.b16 %v774
      %v991 = vunpack.c.l.b16 %v775
      %v992 = vunpack.c.l.b16 %v776
      %v993 = vunpack.c.l.b16 %v777
      %v994 = vunpack.c.l.b16 %v778
      %v995 = vunpack.c.l.b16 %v779
      %v996 = vunpack.c.l.b16 %v780
      %v997 = vunpack.c.l.b16 %v781
      %v998 = vunpack.c.l.b16 %v782
      %v999 = vunpack.c.l.b16 %v783
      %v1000 = vunpack.c.l.b16 %v784
      %v1001 = vunpack.c.l.b16 %v785
      %v1002 = vunpack.c.l.b16 %v786
      %v1003 = vunpack.c.l.b16 %v787
      %v1004 = vunpack.c.l.b16 %v788
      %v1005 = vunpack.c.l.b16 %v789
      %v1006 = vunpack.c.l.b16 %v790
      %v1007 = vunpack.c.l.b16 %v791
      %v1008 = vunpack.c.l.b16 %v792
      %v1009 = vunpack.c.l.b16 %v793
      %v1010 = vunpack.c.l.b16 %v794
      %v1011 = vunpack.c.l.b16 %v795
      %v1012 = vunpack.c.l.b16 %v796
      %v1013 = vpack.c.b16 %v966, %v965
      %v1014 = vpack.c.b16 %v968, %v967
      %v1015 = vpack.c.b16 %v970, %v969
      %v1016 = vpack.c.b16 %v972, %v971
      %v1017 = vpack.c.b16 %v974, %v973
      %v1018 = vpack.c.b16 %v976, %v975
      %v1019 = vpack.c.b16 %v978, %v977
      %v1020 = vpack.c.b16 %v980, %v979
      %v1021 = vpack.c.b16 %v982, %v981
      %v1022 = vpack.c.b16 %v984, %v983
      %v1023 = vpack.c.b16 %v986, %v985
      %v1024 = vpack.c.b16 %v988, %v987
      %v1025 = vpack.c.b16 %v990, %v989
      %v1026 = vpack.c.b16 %v992, %v991
      %v1027 = vpack.c.b16 %v994, %v993
      %v1028 = vpack.c.b16 %v996, %v995
      %v1029 = vpack.c.b16 %v998, %v997
      %v1030 = vpack.c.b16 %v1000, %v999
      %v1031 = vpack.c.b16 %v1002, %v1001
      %v1032 = vpack.c.b16 %v1004, %v1003
      %v1033 = vpack.c.b16 %v1006, %v1005
      %v1034 = vpack.c.b16 %v1008, %v1007
      %v1035 = vpack.c.b16 %v1010, %v1009
      %v1036 = vpack.c.b16 %v1012, %v1011
      %vm1060 = vcmask 1039360
      %v1062 = vsel %vm1060, %v879, 0
      %v1065 = vsel %vm1060, %v882, 0
      %v1068 = vsel %vm1060, %v885, 0
      %v1071 = vsel %vm1060, %v888, 0
      %v1074 = vsel %vm1060, %v891, 0
      %v1077 = vsel %vm1060, %v894, 0
      %v1080 = vsel %vm1060, %v897, 0
      %v1083 = vsel %vm1060, %v900, 0
      %vm1085 = vcmask 1046528
      %vm1086 = vcmask 1047552
      %v1087 = vsel %vm1085, 4294967295, 65535
      %v1088 = vsel %vm1086, %v1087, 0
      %v1090 = vand.u32 %v1036, %v1088
      %1092 = vmatprep.subr.bf16.mxu0 0
      %1093 = vmatpush1.bf16.msra.mxu0 %v1013
      %1094 = vmatprep.subr.bf16.mxu0 0
      %1095 = vmatpush1.bf16.msra.mxu0 %v1014
      %1096 = vmatprep.subr.bf16.mxu0 0
      %1097 = vmatpush1.bf16.msra.mxu0 %v1015
      %1098 = vmatprep.subr.bf16.mxu0 0
      %1099 = vmatpush1.bf16.msra.mxu0 %v1016
      %1100 = vmatprep.subr.bf16.mxu0 0
      %1101 = vmatpush1.bf16.msra.mxu0 %v1017
      %1102 = vmatprep.subr.bf16.mxu0 0
      %1103 = vmatpush1.bf16.msra.mxu0 %v1018
      %1104 = vmatprep.subr.bf16.mxu0 0
      %1105 = vmatpush1.bf16.msra.mxu0 %v1019
      %1106 = vmatprep.subr.bf16.mxu0 0
      %1107 = vmatpush1.bf16.msra.mxu0 %v1020
      %1108 = vmatprep.subr.bf16.mxu0 0
      %1109 = vmatpush1.bf16.msra.mxu0 %v1021
      %1110 = vmatprep.subr.bf16.mxu0 0
      %1111 = vmatpush1.bf16.msra.mxu0 %v1022
      %1112 = vmatprep.subr.bf16.mxu0 0
      %1113 = vmatpush1.bf16.msra.mxu0 %v1023
      %1114 = vmatprep.subr.bf16.mxu0 0
      %1115 = vmatpush1.bf16.msra.mxu0 %v1024
      %1116 = vmatprep.subr.bf16.mxu0 0
      %1117 = vmatpush1.bf16.msra.mxu0 %v1025
      %1118 = vmatprep.subr.bf16.mxu0 0
      %1119 = vmatpush1.bf16.msra.mxu0 %v1026
      %1120 = vmatprep.subr.bf16.mxu0 0
      %1121 = vmatpush1.bf16.msra.mxu0 %v1027
      %1122 = vmatprep.subr.bf16.mxu0 0
      %1123 = vmatpush1.bf16.msra.mxu0 %v1028
      %1124 = vmatprep.mubr.bf16.mxu0 %v878
      %1125 = vmatmul.mubr.bf16.gmra.mrb[0].mxu0 %v877
      %v1126 = vpop.f32.mrb[0].mxu0
      %v1127 = vadd.f32 0.0, %v1126
      %v1128 = vpop.f32.mrb[0].mxu0
      %v1129 = vpop.f32.mrb[0].mxu0
      %v1130 = vadd.f32 0.0, %v1129
      %v1131 = vpop.f32.mrb[0].mxu0
      %1132 = vmatprep.mubr.bf16.mxu0 %v881
      %1133 = vmatmul.mubr.bf16.gmra.mrb[0].mxu0 %v880
      %v1134 = vpop.f32.mrb[0].mxu0
      %v1135 = vadd.f32 0.0, %v1134
      %v1136 = vpop.f32.mrb[0].mxu0
      %v1137 = vpop.f32.mrb[0].mxu0
      %v1138 = vadd.f32 0.0, %v1137
      %v1139 = vpop.f32.mrb[0].mxu0
      %1140 = vmatprep.mubr.bf16.mxu0 %v884
      %1141 = vmatmul.mubr.bf16.gmra.mrb[0].mxu0 %v883
      %v1142 = vpop.f32.mrb[0].mxu0
      %v1143 = vadd.f32 0.0, %v1142
      %v1144 = vpop.f32.mrb[0].mxu0
      %v1145 = vpop.f32.mrb[0].mxu0
      %v1146 = vadd.f32 0.0, %v1145
      %v1147 = vpop.f32.mrb[0].mxu0
      %1148 = vmatprep.mubr.bf16.mxu0 %v887
      %1149 = vmatmul.mubr.bf16.gmra.mrb[0].mxu0 %v886
      %v1150 = vpop.f32.mrb[0].mxu0
      %v1151 = vadd.f32 0.0, %v1150
      %v1152 = vpop.f32.mrb[0].mxu0
      %v1153 = vpop.f32.mrb[0].mxu0
      %v1154 = vadd.f32 0.0, %v1153
      %v1155 = vpop.f32.mrb[0].mxu0
      %1156 = vmatprep.mubr.bf16.mxu0 %v890
      %1157 = vmatmul.mubr.bf16.gmra.mrb[0].mxu0 %v889
      %v1158 = vpop.f32.mrb[0].mxu0
      %v1159 = vadd.f32 0.0, %v1158
      %v1160 = vpop.f32.mrb[0].mxu0
      %v1161 = vpop.f32.mrb[0].mxu0
      %v1162 = vadd.f32 0.0, %v1161
      %v1163 = vpop.f32.mrb[0].mxu0
      %1164 = vmatprep.mubr.bf16.mxu0 %v893
      %1165 = vmatmul.mubr.bf16.gmra.mrb[0].mxu0 %v892
      %v1166 = vpop.f32.mrb[0].mxu0
      %v1167 = vadd.f32 0.0, %v1166
      %v1168 = vpop.f32.mrb[0].mxu0
      %v1169 = vpop.f32.mrb[0].mxu0
      %v1170 = vadd.f32 0.0, %v1169
      %v1171 = vpop.f32.mrb[0].mxu0
      %1172 = vmatprep.mubr.bf16.mxu0 %v896
      %1173 = vmatmul.mubr.bf16.gmra.mrb[0].mxu0 %v895
      %v1174 = vpop.f32.mrb[0].mxu0
      %v1175 = vadd.f32 0.0, %v1174
      %v1176 = vpop.f32.mrb[0].mxu0
      %v1177 = vpop.f32.mrb[0].mxu0
      %v1178 = vadd.f32 0.0, %v1177
      %v1179 = vpop.f32.mrb[0].mxu0
      %1180 = vmatprep.mubr.bf16.mxu0 %v899
      %1181 = vmatmul.mubr.bf16.gmra.mrb[0].mxu0 %v898
      %v1182 = vpop.f32.mrb[0].mxu0
      %v1183 = vadd.f32 0.0, %v1182
      %v1184 = vpop.f32.mrb[0].mxu0
      %v1185 = vpop.f32.mrb[0].mxu0
      %v1186 = vadd.f32 0.0, %v1185
      %v1187 = vpop.f32.mrb[0].mxu0
      %1188 = vdwg.mxu0
      %1189 = vmatprep.subr.bf16.mxu0 0
      %1190 = vmatpush1.bf16.msra.mxu0 %v1029
      %1191 = vmatprep.subr.bf16.mxu0 0
      %1192 = vmatpush1.bf16.msra.mxu0 %v1030
      %1193 = vmatprep.subr.bf16.mxu0 0
      %1194 = vmatpush1.bf16.msra.mxu0 %v1031
      %1195 = vmatprep.subr.bf16.mxu0 0
      %1196 = vmatpush1.bf16.msra.mxu0 %v1032
      %1197 = vmatprep.subr.bf16.mxu0 0
      %1198 = vmatpush1.bf16.msra.mxu0 %v1033
      %1199 = vmatprep.subr.bf16.mxu0 0
      %1200 = vmatpush1.bf16.msra.mxu0 %v1034
      %1201 = vmatprep.subr.bf16.mxu0 0
      %1202 = vmatpush1.bf16.msra.mxu0 %v1035
      %1203 = vmatprep.subr.bf16.mxu0 0
      %1204 = vmatpush1.bf16.msra.mxu0 %v1090
      %1205 = vmatprep.subr.bf16.mxu0 0
      %1206 = vmatpush1.bf16.msra.mxu0 0
      %1207 = vmatprep.subr.bf16.mxu0 0
      %1208 = vmatpush1.bf16.msra.mxu0 0
      %1209 = vmatprep.subr.bf16.mxu0 0
      %1210 = vmatpush1.bf16.msra.mxu0 0
      %1211 = vmatprep.subr.bf16.mxu0 0
      %1212 = vmatpush1.bf16.msra.mxu0 0
      %1213 = vmatprep.subr.bf16.mxu0 0
      %1214 = vmatpush1.bf16.msra.mxu0 0
      %1215 = vmatprep.subr.bf16.mxu0 0
      %1216 = vmatpush1.bf16.msra.mxu0 0
      %1217 = vmatprep.subr.bf16.mxu0 0
      %1218 = vmatpush1.bf16.msra.mxu0 0
      %1219 = vmatprep.subr.bf16.mxu0 0
      %1220 = vmatpush1.bf16.msra.mxu0 0
      %1221 = vmatprep.mubr.bf16.mxu0 0
      %1222 = vmatmul.mubr.bf16.gmra.mrb[0].mxu0 %v1062
      %v1223 = vpop.f32.mrb[0].mxu0
      %v1224 = vadd.f32 %v1127, %v1223
      %v1225 = vpop.f32.mrb[0].mxu0
      %v1226 = vpop.f32.mrb[0].mxu0
      %v1227 = vadd.f32 %v1130, %v1226
      %v1228 = vpop.f32.mrb[0].mxu0
      %1229 = vmatprep.mubr.bf16.mxu0 0
      %1230 = vmatmul.mubr.bf16.gmra.mrb[0].mxu0 %v1065
      %v1231 = vpop.f32.mrb[0].mxu0
      %v1232 = vadd.f32 %v1135, %v1231
      %v1233 = vpop.f32.mrb[0].mxu0
      %v1234 = vpop.f32.mrb[0].mxu0
      %v1235 = vadd.f32 %v1138, %v1234
      %v1236 = vpop.f32.mrb[0].mxu0
      %1237 = vmatprep.mubr.bf16.mxu0 0
      %1238 = vmatmul.mubr.bf16.gmra.mrb[0].mxu0 %v1068
      %v1239 = vpop.f32.mrb[0].mxu0
      %v1240 = vadd.f32 %v1143, %v1239
      %v1241 = vpop.f32.mrb[0].mxu0
      %v1242 = vpop.f32.mrb[0].mxu0
      %v1243 = vadd.f32 %v1146, %v1242
      %v1244 = vpop.f32.mrb[0].mxu0
      %1245 = vmatprep.mubr.bf16.mxu0 0
      %1246 = vmatmul.mubr.bf16.gmra.mrb[0].mxu0 %v1071
      %v1247 = vpop.f32.mrb[0].mxu0
      %v1248 = vadd.f32 %v1151, %v1247
      %v1249 = vpop.f32.mrb[0].mxu0
      %v1250 = vpop.f32.mrb[0].mxu0
      %v1251 = vadd.f32 %v1154, %v1250
      %v1252 = vpop.f32.mrb[0].mxu0
      %1253 = vmatprep.mubr.bf16.mxu0 0
      %1254 = vmatmul.mubr.bf16.gmra.mrb[0].mxu0 %v1074
      %v1255 = vpop.f32.mrb[0].mxu0
      %v1256 = vadd.f32 %v1159, %v1255
      %v1257 = vpop.f32.mrb[0].mxu0
      %v1258 = vpop.f32.mrb[0].mxu0
      %v1259 = vadd.f32 %v1162, %v1258
      %v1260 = vpop.f32.mrb[0].mxu0
      %1261 = vmatprep.mubr.bf16.mxu0 0
      %1262 = vmatmul.mubr.bf16.gmra.mrb[0].mxu0 %v1077
      %v1263 = vpop.f32.mrb[0].mxu0
      %v1264 = vadd.f32 %v1167, %v1263
      %v1265 = vpop.f32.mrb[0].mxu0
      %v1266 = vpop.f32.mrb[0].mxu0
      %v1267 = vadd.f32 %v1170, %v1266
      %v1268 = vpop.f32.mrb[0].mxu0
      %1269 = vmatprep.mubr.bf16.mxu0 0
      %1270 = vmatmul.mubr.bf16.gmra.mrb[0].mxu0 %v1080
      %v1271 = vpop.f32.mrb[0].mxu0
      %v1272 = vadd.f32 %v1175, %v1271
      %v1273 = vpop.f32.mrb[0].mxu0
      %v1274 = vpop.f32.mrb[0].mxu0
      %v1275 = vadd.f32 %v1178, %v1274
      %v1276 = vpop.f32.mrb[0].mxu0
      %1277 = vmatprep.mubr.bf16.mxu0 0
      %1278 = vmatmul.mubr.bf16.gmra.mrb[0].mxu0 %v1083
      %v1279 = vpop.f32.mrb[0].mxu0
      %v1280 = vadd.f32 %v1183, %v1279
      %v1281 = vpop.f32.mrb[0].mxu0
      %v1282 = vpop.f32.mrb[0].mxu0
      %v1283 = vadd.f32 %v1186, %v1282
      %v1284 = vpop.f32.mrb[0].mxu0
      %1285 = vdwg.mxu0
      %v1318 = vunpack.c.l.b16 %v637
      %v1319 = vunpack.c.h.b16 %v637
      %v1320 = vunpack.c.l.b16 %v638
      %v1321 = vunpack.c.l.b16 %v639
      %v1322 = vunpack.c.h.b16 %v639
      %v1323 = vunpack.c.l.b16 %v640
      %v1324 = vunpack.c.l.b16 %v641
      %v1325 = vunpack.c.h.b16 %v641
      %v1326 = vunpack.c.l.b16 %v642
      %v1327 = vunpack.c.l.b16 %v643
      %v1328 = vunpack.c.h.b16 %v643
      %v1329 = vunpack.c.l.b16 %v644
      %v1330 = vunpack.c.l.b16 %v645
      %v1331 = vunpack.c.h.b16 %v645
      %v1332 = vunpack.c.l.b16 %v646
      %v1333 = vunpack.c.l.b16 %v647
      %v1334 = vunpack.c.h.b16 %v647
      %v1335 = vunpack.c.l.b16 %v648
      %v1336 = vunpack.c.l.b16 %v649
      %v1337 = vunpack.c.h.b16 %v649
      %v1338 = vunpack.c.l.b16 %v650
      %v1339 = vunpack.c.l.b16 %v651
      %v1340 = vunpack.c.h.b16 %v651
      %v1341 = vunpack.c.l.b16 %v652
      %v1342 = vunpack.c.l.b16 %v653
      %v1343 = vunpack.c.h.b16 %v653
      %v1344 = vunpack.c.l.b16 %v654
      %v1345 = vunpack.c.l.b16 %v655
      %v1346 = vunpack.c.h.b16 %v655
      %v1347 = vunpack.c.l.b16 %v656
      %v1348 = vunpack.c.l.b16 %v657
      %v1349 = vunpack.c.h.b16 %v657
      %v1350 = vunpack.c.l.b16 %v658
      %v1351 = vunpack.c.l.b16 %v659
      %v1352 = vunpack.c.h.b16 %v659
      %v1353 = vunpack.c.l.b16 %v660
      %v1354 = vunpack.c.l.b16 %v661
      %v1355 = vunpack.c.h.b16 %v661
      %v1356 = vunpack.c.l.b16 %v662
      %v1357 = vunpack.c.l.b16 %v663
      %v1358 = vunpack.c.h.b16 %v663
      %v1359 = vunpack.c.l.b16 %v664
      %v1360 = vunpack.c.l.b16 %v665
      %v1361 = vunpack.c.h.b16 %v665
      %v1362 = vunpack.c.l.b16 %v666
      %v1363 = vunpack.c.l.b16 %v667
      %v1364 = vunpack.c.h.b16 %v667
      %v1365 = vunpack.c.l.b16 %v668
      %v1366 = vpack.c.b16 %v1321, %v1318
      %v1367 = vpack.c.b16 %v1322, %v1319
      %v1368 = vpack.c.b16 %v1323, %v1320
      %v1369 = vpack.c.b16 %v1327, %v1324
      %v1370 = vpack.c.b16 %v1328, %v1325
      %v1371 = vpack.c.b16 %v1329, %v1326
      %v1372 = vpack.c.b16 %v1333, %v1330
      %v1373 = vpack.c.b16 %v1334, %v1331
      %v1374 = vpack.c.b16 %v1335, %v1332
      %v1375 = vpack.c.b16 %v1339, %v1336
      %v1376 = vpack.c.b16 %v1340, %v1337
      %v1377 = vpack.c.b16 %v1341, %v1338
      %v1378 = vpack.c.b16 %v1345, %v1342
      %v1379 = vpack.c.b16 %v1346, %v1343
      %v1380 = vpack.c.b16 %v1347, %v1344
      %v1381 = vpack.c.b16 %v1351, %v1348
      %v1382 = vpack.c.b16 %v1352, %v1349
      %v1383 = vpack.c.b16 %v1353, %v1350
      %v1384 = vpack.c.b16 %v1357, %v1354
      %v1385 = vpack.c.b16 %v1358, %v1355
      %v1386 = vpack.c.b16 %v1359, %v1356
      %v1387 = vpack.c.b16 %v1363, %v1360
      %v1388 = vpack.c.b16 %v1364, %v1361
      %v1389 = vpack.c.b16 %v1365, %v1362
      %v1454 = vunpack.c.l.b16 %v669
      %v1455 = vunpack.c.l.b16 %v670
      %v1456 = vunpack.c.l.b16 %v671
      %v1457 = vunpack.c.l.b16 %v672
      %v1458 = vunpack.c.l.b16 %v673
      %v1459 = vunpack.c.l.b16 %v674
      %v1460 = vunpack.c.l.b16 %v675
      %v1461 = vunpack.c.l.b16 %v676
      %v1462 = vunpack.c.l.b16 %v677
      %v1463 = vunpack.c.l.b16 %v678
      %v1464 = vunpack.c.l.b16 %v679
      %v1465 = vunpack.c.l.b16 %v680
      %v1466 = vunpack.c.l.b16 %v681
      %v1467 = vunpack.c.l.b16 %v682
      %v1468 = vunpack.c.l.b16 %v683
      %v1469 = vunpack.c.l.b16 %v684
      %v1470 = vunpack.c.l.b16 %v685
      %v1471 = vunpack.c.l.b16 %v686
      %v1472 = vunpack.c.l.b16 %v687
      %v1473 = vunpack.c.l.b16 %v688
      %v1474 = vunpack.c.l.b16 %v689
      %v1475 = vunpack.c.l.b16 %v690
      %v1476 = vunpack.c.l.b16 %v691
      %v1477 = vunpack.c.l.b16 %v692
      %v1478 = vunpack.c.l.b16 %v693
      %v1479 = vunpack.c.l.b16 %v694
      %v1480 = vunpack.c.l.b16 %v695
      %v1481 = vunpack.c.l.b16 %v696
      %v1482 = vunpack.c.l.b16 %v697
      %v1483 = vunpack.c.l.b16 %v698
      %v1484 = vunpack.c.l.b16 %v699
      %v1485 = vunpack.c.l.b16 %v700
      %v1486 = vunpack.c.l.b16 %v701
      %v1487 = vunpack.c.l.b16 %v702
      %v1488 = vunpack.c.l.b16 %v703
      %v1489 = vunpack.c.l.b16 %v704
      %v1490 = vunpack.c.l.b16 %v705
      %v1491 = vunpack.c.l.b16 %v706
      %v1492 = vunpack.c.l.b16 %v707
      %v1493 = vunpack.c.l.b16 %v708
      %v1494 = vunpack.c.l.b16 %v709
      %v1495 = vunpack.c.l.b16 %v710
      %v1496 = vunpack.c.l.b16 %v711
      %v1497 = vunpack.c.l.b16 %v712
      %v1498 = vunpack.c.l.b16 %v713
      %v1499 = vunpack.c.l.b16 %v714
      %v1500 = vunpack.c.l.b16 %v715
      %v1501 = vunpack.c.l.b16 %v716
      %v1502 = vpack.c.b16 %v1455, %v1454
      %v1503 = vpack.c.b16 %v1457, %v1456
      %v1504 = vpack.c.b16 %v1459, %v1458
      %v1505 = vpack.c.b16 %v1461, %v1460
      %v1506 = vpack.c.b16 %v1463, %v1462
      %v1507 = vpack.c.b16 %v1465, %v1464
      %v1508 = vpack.c.b16 %v1467, %v1466
      %v1509 = vpack.c.b16 %v1469, %v1468
      %v1510 = vpack.c.b16 %v1471, %v1470
      %v1511 = vpack.c.b16 %v1473, %v1472
      %v1512 = vpack.c.b16 %v1475, %v1474
      %v1513 = vpack.c.b16 %v1477, %v1476
      %v1514 = vpack.c.b16 %v1479, %v1478
      %v1515 = vpack.c.b16 %v1481, %v1480
      %v1516 = vpack.c.b16 %v1483, %v1482
      %v1517 = vpack.c.b16 %v1485, %v1484
      %v1518 = vpack.c.b16 %v1487, %v1486
      %v1519 = vpack.c.b16 %v1489, %v1488
      %v1520 = vpack.c.b16 %v1491, %v1490
      %v1521 = vpack.c.b16 %v1493, %v1492
      %v1522 = vpack.c.b16 %v1495, %v1494
      %v1523 = vpack.c.b16 %v1497, %v1496
      %v1524 = vpack.c.b16 %v1499, %v1498
      %v1525 = vpack.c.b16 %v1501, %v1500
      %v1550 = vsel %vm1060, %v1368, 0
      %v1553 = vsel %vm1060, %v1371, 0
      %v1556 = vsel %vm1060, %v1374, 0
      %v1559 = vsel %vm1060, %v1377, 0
      %v1562 = vsel %vm1060, %v1380, 0
      %v1565 = vsel %vm1060, %v1383, 0
      %v1568 = vsel %vm1060, %v1386, 0
      %v1571 = vsel %vm1060, %v1389, 0
      %v1574 = vand.u32 %v1525, %v1088
      %1576 = vmatprep.subr.bf16.mxu0 0
      %1577 = vmatpush1.bf16.msra.mxu0 %v1502
      %1578 = vmatprep.subr.bf16.mxu0 0
      %1579 = vmatpush1.bf16.msra.mxu0 %v1503
      %1580 = vmatprep.subr.bf16.mxu0 0
      %1581 = vmatpush1.bf16.msra.mxu0 %v1504
      %1582 = vmatprep.subr.bf16.mxu0 0
      %1583 = vmatpush1.bf16.msra.mxu0 %v1505
      %1584 = vmatprep.subr.bf16.mxu0 0
      %1585 = vmatpush1.bf16.msra.mxu0 %v1506
      %1586 = vmatprep.subr.bf16.mxu0 0
      %1587 = vmatpush1.bf16.msra.mxu0 %v1507
      %1588 = vmatprep.subr.bf16.mxu0 0
      %1589 = vmatpush1.bf16.msra.mxu0 %v1508
      %1590 = vmatprep.subr.bf16.mxu0 0
      %1591 = vmatpush1.bf16.msra.mxu0 %v1509
      %1592 = vmatprep.subr.bf16.mxu0 0
      %1593 = vmatpush1.bf16.msra.mxu0 %v1510
      %1594 = vmatprep.subr.bf16.mxu0 0
      %1595 = vmatpush1.bf16.msra.mxu0 %v1511
      %1596 = vmatprep.subr.bf16.mxu0 0
      %1597 = vmatpush1.bf16.msra.mxu0 %v1512
      %1598 = vmatprep.subr.bf16.mxu0 0
      %1599 = vmatpush1.bf16.msra.mxu0 %v1513
      %1600 = vmatprep.subr.bf16.mxu0 0
      %1601 = vmatpush1.bf16.msra.mxu0 %v1514
      %1602 = vmatprep.subr.bf16.mxu0 0
      %1603 = vmatpush1.bf16.msra.mxu0 %v1515
      %1604 = vmatprep.subr.bf16.mxu0 0
      %1605 = vmatpush1.bf16.msra.mxu0 %v1516
      %1606 = vmatprep.subr.bf16.mxu0 0
      %1607 = vmatpush1.bf16.msra.mxu0 %v1517
      %1608 = vmatprep.mubr.bf16.mxu0 %v1367
      %1609 = vmatmul.mubr.bf16.gmra.mrb[0].mxu0 %v1366
      %v1610 = vpop.f32.mrb[0].mxu0
      %v1611 = vadd.f32 %v1224, %v1610
      %v1612 = vpop.f32.mrb[0].mxu0
      %v1613 = vpop.f32.mrb[0].mxu0
      %v1614 = vadd.f32 %v1227, %v1613
      %v1615 = vpop.f32.mrb[0].mxu0
      %1616 = vmatprep.mubr.bf16.mxu0 %v1370
      %1617 = vmatmul.mubr.bf16.gmra.mrb[0].mxu0 %v1369
      %v1618 = vpop.f32.mrb[0].mxu0
      %v1619 = vadd.f32 %v1232, %v1618
      %v1620 = vpop.f32.mrb[0].mxu0
      %v1621 = vpop.f32.mrb[0].mxu0
      %v1622 = vadd.f32 %v1235, %v1621
      %v1623 = vpop.f32.mrb[0].mxu0
      %1624 = vmatprep.mubr.bf16.mxu0 %v1373
      %1625 = vmatmul.mubr.bf16.gmra.mrb[0].mxu0 %v1372
      %v1626 = vpop.f32.mrb[0].mxu0
      %v1627 = vadd.f32 %v1240, %v1626
      %v1628 = vpop.f32.mrb[0].mxu0
      %v1629 = vpop.f32.mrb[0].mxu0
      %v1630 = vadd.f32 %v1243, %v1629
      %v1631 = vpop.f32.mrb[0].mxu0
      %1632 = vmatprep.mubr.bf16.mxu0 %v1376
      %1633 = vmatmul.mubr.bf16.gmra.mrb[0].mxu0 %v1375
      %v1634 = vpop.f32.mrb[0].mxu0
      %v1635 = vadd.f32 %v1248, %v1634
      %v1636 = vpop.f32.mrb[0].mxu0
      %v1637 = vpop.f32.mrb[0].mxu0
      %v1638 = vadd.f32 %v1251, %v1637
      %v1639 = vpop.f32.mrb[0].mxu0
      %1640 = vmatprep.mubr.bf16.mxu0 %v1379
      %1641 = vmatmul.mubr.bf16.gmra.mrb[0].mxu0 %v1378
      %v1642 = vpop.f32.mrb[0].mxu0
      %v1643 = vadd.f32 %v1256, %v1642
      %v1644 = vpop.f32.mrb[0].mxu0
      %v1645 = vpop.f32.mrb[0].mxu0
      %v1646 = vadd.f32 %v1259, %v1645
      %v1647 = vpop.f32.mrb[0].mxu0
      %1648 = vmatprep.mubr.bf16.mxu0 %v1382
      %1649 = vmatmul.mubr.bf16.gmra.mrb[0].mxu0 %v1381
      %v1650 = vpop.f32.mrb[0].mxu0
      %v1651 = vadd.f32 %v1264, %v1650
      %v1652 = vpop.f32.mrb[0].mxu0
      %v1653 = vpop.f32.mrb[0].mxu0
      %v1654 = vadd.f32 %v1267, %v1653
      %v1655 = vpop.f32.mrb[0].mxu0
      %1656 = vmatprep.mubr.bf16.mxu0 %v1385
      %1657 = vmatmul.mubr.bf16.gmra.mrb[0].mxu0 %v1384
      %v1658 = vpop.f32.mrb[0].mxu0
      %v1659 = vadd.f32 %v1272, %v1658
      %v1660 = vpop.f32.mrb[0].mxu0
      %v1661 = vpop.f32.mrb[0].mxu0
      %v1662 = vadd.f32 %v1275, %v1661
      %v1663 = vpop.f32.mrb[0].mxu0
      %1664 = vmatprep.mubr.bf16.mxu0 %v1388
      %1665 = vmatmul.mubr.bf16.gmra.mrb[0].mxu0 %v1387
      %v1666 = vpop.f32.mrb[0].mxu0
      %v1667 = vadd.f32 %v1280, %v1666
      %v1668 = vpop.f32.mrb[0].mxu0
      %v1669 = vpop.f32.mrb[0].mxu0
      %v1670 = vadd.f32 %v1283, %v1669
      %v1671 = vpop.f32.mrb[0].mxu0
      %1672 = vdwg.mxu0
      %1673 = vmatprep.subr.bf16.mxu0 0
      %1674 = vmatpush1.bf16.msra.mxu0 %v1518
      %1675 = vmatprep.subr.bf16.mxu0 0
      %1676 = vmatpush1.bf16.msra.mxu0 %v1519
      %1677 = vmatprep.subr.bf16.mxu0 0
      %1678 = vmatpush1.bf16.msra.mxu0 %v1520
      %1679 = vmatprep.subr.bf16.mxu0 0
      %1680 = vmatpush1.bf16.msra.mxu0 %v1521
      %1681 = vmatprep.subr.bf16.mxu0 0
      %1682 = vmatpush1.bf16.msra.mxu0 %v1522
      %1683 = vmatprep.subr.bf16.mxu0 0
      %1684 = vmatpush1.bf16.msra.mxu0 %v1523
      %1685 = vmatprep.subr.bf16.mxu0 0
      %1686 = vmatpush1.bf16.msra.mxu0 %v1524
      %1687 = vmatprep.subr.bf16.mxu0 0
      %1688 = vmatpush1.bf16.msra.mxu0 %v1574
      %1689 = vmatprep.subr.bf16.mxu0 0
      %1690 = vmatpush1.bf16.msra.mxu0 0
      %1691 = vmatprep.subr.bf16.mxu0 0
      %1692 = vmatpush1.bf16.msra.mxu0 0
      %1693 = vmatprep.subr.bf16.mxu0 0
      %1694 = vmatpush1.bf16.msra.mxu0 0
      %1695 = vmatprep.subr.bf16.mxu0 0
      %1696 = vmatpush1.bf16.msra.mxu0 0
      %1697 = vmatprep.subr.bf16.mxu0 0
      %1698 = vmatpush1.bf16.msra.mxu0 0
      %1699 = vmatprep.subr.bf16.mxu0 0
      %1700 = vmatpush1.bf16.msra.mxu0 0
      %1701 = vmatprep.subr.bf16.mxu0 0
      %1702 = vmatpush1.bf16.msra.mxu0 0
      %1703 = vmatprep.subr.bf16.mxu0 0
      %1704 = vmatpush1.bf16.msra.mxu0 0
      %1705 = vmatprep.mubr.bf16.mxu0 0
      %1706 = vmatmul.mubr.bf16.gmra.mrb[0].mxu0 %v1550
      %v1707 = vpop.f32.mrb[0].mxu0
      %v1708 = vadd.f32 %v1611, %v1707
      %v1709 = vpop.f32.mrb[0].mxu0
      %v1710 = vpop.f32.mrb[0].mxu0
      %v1711 = vadd.f32 %v1614, %v1710
      %v1712 = vpop.f32.mrb[0].mxu0
      %1713 = vmatprep.mubr.bf16.mxu0 0
      %1714 = vmatmul.mubr.bf16.gmra.mrb[0].mxu0 %v1553
      %v1715 = vpop.f32.mrb[0].mxu0
      %v1716 = vadd.f32 %v1619, %v1715
      %v1717 = vpop.f32.mrb[0].mxu0
      %v1718 = vpop.f32.mrb[0].mxu0
      %v1719 = vadd.f32 %v1622, %v1718
      %v1720 = vpop.f32.mrb[0].mxu0
      %1721 = vmatprep.mubr.bf16.mxu0 0
      %1722 = vmatmul.mubr.bf16.gmra.mrb[0].mxu0 %v1556
      %v1723 = vpop.f32.mrb[0].mxu0
      %v1724 = vadd.f32 %v1627, %v1723
      %v1725 = vpop.f32.mrb[0].mxu0
      %v1726 = vpop.f32.mrb[0].mxu0
      %v1727 = vadd.f32 %v1630, %v1726
      %v1728 = vpop.f32.mrb[0].mxu0
      %1729 = vmatprep.mubr.bf16.mxu0 0
      %1730 = vmatmul.mubr.bf16.gmra.mrb[0].mxu0 %v1559
      %v1731 = vpop.f32.mrb[0].mxu0
      %v1732 = vadd.f32 %v1635, %v1731
      %v1733 = vpop.f32.mrb[0].mxu0
      %v1734 = vpop.f32.mrb[0].mxu0
      %v1735 = vadd.f32 %v1638, %v1734
      %v1736 = vpop.f32.mrb[0].mxu0
      %1737 = vmatprep.mubr.bf16.mxu0 0
      %1738 = vmatmul.mubr.bf16.gmra.mrb[0].mxu0 %v1562
      %v1739 = vpop.f32.mrb[0].mxu0
      %v1740 = vadd.f32 %v1643, %v1739
      %v1741 = vpop.f32.mrb[0].mxu0
      %v1742 = vpop.f32.mrb[0].mxu0
      %v1743 = vadd.f32 %v1646, %v1742
      %v1744 = vpop.f32.mrb[0].mxu0
      %1745 = vmatprep.mubr.bf16.mxu0 0
      %1746 = vmatmul.mubr.bf16.gmra.mrb[0].mxu0 %v1565
      %v1747 = vpop.f32.mrb[0].mxu0
      %v1748 = vadd.f32 %v1651, %v1747
      %v1749 = vpop.f32.mrb[0].mxu0
      %v1750 = vpop.f32.mrb[0].mxu0
      %v1751 = vadd.f32 %v1654, %v1750
      %v1752 = vpop.f32.mrb[0].mxu0
      %1753 = vmatprep.mubr.bf16.mxu0 0
      %1754 = vmatmul.mubr.bf16.gmra.mrb[0].mxu0 %v1568
      %v1755 = vpop.f32.mrb[0].mxu0
      %v1756 = vadd.f32 %v1659, %v1755
      %v1757 = vpop.f32.mrb[0].mxu0
      %v1758 = vpop.f32.mrb[0].mxu0
      %v1759 = vadd.f32 %v1662, %v1758
      %v1760 = vpop.f32.mrb[0].mxu0
      %1761 = vmatprep.mubr.bf16.mxu0 0
      %1762 = vmatmul.mubr.bf16.gmra.mrb[0].mxu0 %v1571
      %v1763 = vpop.f32.mrb[0].mxu0
      %v1764 = vadd.f32 %v1667, %v1763
      %v1765 = vpop.f32.mrb[0].mxu0
      %v1766 = vpop.f32.mrb[0].mxu0
      %v1767 = vadd.f32 %v1670, %v1766
      %v1768 = vpop.f32.mrb[0].mxu0
      %1769 = vdwg.mxu0
      %v1770 = vld [vmem:[%s590] sm:$0xf]
      %v1771 = vld [vmem:[%s590 + $0x4] sm:$0xf]
      %v1772 = vld [vmem:[%s590 + $0x8] sm:$0xf]
      %v1773 = vld [vmem:[%s590 + $0xc] sm:$0xf]
      %v1774 = vld [vmem:[%s590 + $0x10] sm:$0xf]
      %v1775 = vld [vmem:[%s590 + $0x14] sm:$0xf]
      %v1776 = vld [vmem:[%s590 + $0x18] sm:$0xf]
      %v1777 = vld [vmem:[%s590 + $0x1c] sm:$0xf]
      %v1778 = vld [vmem:[%s590 + $0x20] sm:$0xf]
      %v1779 = vld [vmem:[%s590 + $0x24] sm:$0xf]
      %v1780 = vld [vmem:[%s590 + $0x28] sm:$0xf]
      %v1781 = vld [vmem:[%s590 + $0x2c] sm:$0xf]
      %v1782 = vld [vmem:[%s590 + $0x30] sm:$0xf]
      %v1783 = vld [vmem:[%s590 + $0x34] sm:$0xf]
      %v1784 = vld [vmem:[%s590 + $0x38] sm:$0xf]
      %v1785 = vld [vmem:[%s590 + $0x3c] sm:$0xf]
      %v1786 = vld [vmem:[%s7] sm:$0xf]
      %v1787 = vld [vmem:[%s7 + $0x4] sm:$0xf]
      %v1788 = vld [vmem:[%s7 + $0x8] sm:$0xf]
      %v1789 = vld [vmem:[%s7 + $0xc] sm:$0xf]
      %v1806 = vunpack.c.l.b16 %v1770
      %v1807 = vunpack.c.l.b16 %v1771
      %v1808 = vunpack.c.l.b16 %v1772
      %v1809 = vunpack.c.l.b16 %v1773
      %v1810 = vunpack.c.l.b16 %v1774
      %v1811 = vunpack.c.l.b16 %v1775
      %v1812 = vunpack.c.l.b16 %v1776
      %v1813 = vunpack.c.l.b16 %v1777
      %v1814 = vunpack.c.l.b16 %v1778
      %v1815 = vunpack.c.l.b16 %v1779
      %v1816 = vunpack.c.l.b16 %v1780
      %v1817 = vunpack.c.l.b16 %v1781
      %v1818 = vunpack.c.l.b16 %v1782
      %v1819 = vunpack.c.l.b16 %v1783
      %v1820 = vunpack.c.l.b16 %v1784
      %v1821 = vunpack.c.l.b16 %v1785
      %v1822 = vpack.c.b16 %v1807, %v1806
      %v1823 = vpack.c.b16 %v1809, %v1808
      %v1824 = vpack.c.b16 %v1811, %v1810
      %v1825 = vpack.c.b16 %v1813, %v1812
      %v1826 = vpack.c.b16 %v1815, %v1814
      %v1827 = vpack.c.b16 %v1817, %v1816
      %v1828 = vpack.c.b16 %v1819, %v1818
      %v1829 = vpack.c.b16 %v1821, %v1820
      %v1834 = vunpack.c.l.b16 %v1786
      %v1835 = vunpack.c.l.b16 %v1787
      %v1836 = vunpack.c.l.b16 %v1788
      %v1837 = vunpack.c.l.b16 %v1789
      %v1838 = vpack.c.b16 %v1835, %v1834
      %v1839 = vpack.c.b16 %v1837, %v1836
      %vm1842 = vcmask 261120
      %v1844 = vsel %vm1842, %v1822, 0
      %v1847 = vsel %vm1842, %v1823, 0
      %v1850 = vsel %vm1842, %v1824, 0
      %v1853 = vsel %vm1842, %v1825, 0
      %v1856 = vsel %vm1842, %v1826, 0
      %v1859 = vsel %vm1842, %v1827, 0
      %v1862 = vsel %vm1842, %v1828, 0
      %v1865 = vsel %vm1842, %v1829, 0
      %1867 = vmatprep.subr.bf16.mxu0 0
      %1868 = vmatpush1.bf16.msra.mxu0 %v1838
      %1869 = vmatprep.subr.bf16.mxu0 0
      %1870 = vmatpush1.bf16.msra.mxu0 %v1839
      %1871 = vmatprep.subr.bf16.mxu0 0
      %1872 = vmatpush1.bf16.msra.mxu0 0
      %1873 = vmatprep.subr.bf16.mxu0 0
      %1874 = vmatpush1.bf16.msra.mxu0 0
      %1875 = vmatprep.subr.bf16.mxu0 0
      %1876 = vmatpush1.bf16.msra.mxu0 0
      %1877 = vmatprep.subr.bf16.mxu0 0
      %1878 = vmatpush1.bf16.msra.mxu0 0
      %1879 = vmatprep.subr.bf16.mxu0 0
      %1880 = vmatpush1.bf16.msra.mxu0 0
      %1881 = vmatprep.subr.bf16.mxu0 0
      %1882 = vmatpush1.bf16.msra.mxu0 0
      %1883 = vmatprep.subr.bf16.mxu0 0
      %1884 = vmatpush1.bf16.msra.mxu0 0
      %1885 = vmatprep.subr.bf16.mxu0 0
      %1886 = vmatpush1.bf16.msra.mxu0 0
      %1887 = vmatprep.subr.bf16.mxu0 0
      %1888 = vmatpush1.bf16.msra.mxu0 0
      %1889 = vmatprep.subr.bf16.mxu0 0
      %1890 = vmatpush1.bf16.msra.mxu0 0
      %1891 = vmatprep.subr.bf16.mxu0 0
      %1892 = vmatpush1.bf16.msra.mxu0 0
      %1893 = vmatprep.subr.bf16.mxu0 0
      %1894 = vmatpush1.bf16.msra.mxu0 0
      %1895 = vmatprep.subr.bf16.mxu0 0
      %1896 = vmatpush1.bf16.msra.mxu0 0
      %1897 = vmatprep.subr.bf16.mxu0 0
      %1898 = vmatpush1.bf16.msra.mxu0 0
      %1899 = vmatprep.mubr.bf16.mxu0 0
      %1900 = vmatmul.mubr.bf16.gmra.mrb[0].mxu0 %v1844
      %v1901 = vpop.f32.mrb[0].mxu0
      %v1902 = vadd.f32 0.0, %v1901
      %v1903 = vpop.f32.mrb[0].mxu0
      %v1904 = vpop.f32.mrb[0].mxu0
      %v1905 = vadd.f32 0.0, %v1904
      %v1906 = vpop.f32.mrb[0].mxu0
      %1907 = vmatprep.mubr.bf16.mxu0 0
      %1908 = vmatmul.mubr.bf16.gmra.mrb[0].mxu0 %v1847
      %v1909 = vpop.f32.mrb[0].mxu0
      %v1910 = vadd.f32 0.0, %v1909
      %v1911 = vpop.f32.mrb[0].mxu0
      %v1912 = vpop.f32.mrb[0].mxu0
      %v1913 = vadd.f32 0.0, %v1912
      %v1914 = vpop.f32.mrb[0].mxu0
      %1915 = vmatprep.mubr.bf16.mxu0 0
      %1916 = vmatmul.mubr.bf16.gmra.mrb[0].mxu0 %v1850
      %v1917 = vpop.f32.mrb[0].mxu0
      %v1918 = vadd.f32 0.0, %v1917
      %v1919 = vpop.f32.mrb[0].mxu0
      %v1920 = vpop.f32.mrb[0].mxu0
      %v1921 = vadd.f32 0.0, %v1920
      %v1922 = vpop.f32.mrb[0].mxu0
      %1923 = vmatprep.mubr.bf16.mxu0 0
      %1924 = vmatmul.mubr.bf16.gmra.mrb[0].mxu0 %v1853
      %v1925 = vpop.f32.mrb[0].mxu0
      %v1926 = vadd.f32 0.0, %v1925
      %v1927 = vpop.f32.mrb[0].mxu0
      %v1928 = vpop.f32.mrb[0].mxu0
      %v1929 = vadd.f32 0.0, %v1928
      %v1930 = vpop.f32.mrb[0].mxu0
      %1931 = vmatprep.mubr.bf16.mxu0 0
      %1932 = vmatmul.mubr.bf16.gmra.mrb[0].mxu0 %v1856
      %v1933 = vpop.f32.mrb[0].mxu0
      %v1934 = vadd.f32 0.0, %v1933
      %v1935 = vpop.f32.mrb[0].mxu0
      %v1936 = vpop.f32.mrb[0].mxu0
      %v1937 = vadd.f32 0.0, %v1936
      %v1938 = vpop.f32.mrb[0].mxu0
      %1939 = vmatprep.mubr.bf16.mxu0 0
      %1940 = vmatmul.mubr.bf16.gmra.mrb[0].mxu0 %v1859
      %v1941 = vpop.f32.mrb[0].mxu0
      %v1942 = vadd.f32 0.0, %v1941
      %v1943 = vpop.f32.mrb[0].mxu0
      %v1944 = vpop.f32.mrb[0].mxu0
      %v1945 = vadd.f32 0.0, %v1944
      %v1946 = vpop.f32.mrb[0].mxu0
      %1947 = vmatprep.mubr.bf16.mxu0 0
      %1948 = vmatmul.mubr.bf16.gmra.mrb[0].mxu0 %v1862
      %v1949 = vpop.f32.mrb[0].mxu0
      %v1950 = vadd.f32 0.0, %v1949
      %v1951 = vpop.f32.mrb[0].mxu0
      %v1952 = vpop.f32.mrb[0].mxu0
      %v1953 = vadd.f32 0.0, %v1952
      %v1954 = vpop.f32.mrb[0].mxu0
      %1955 = vmatprep.mubr.bf16.mxu0 0
      %1956 = vmatmul.mubr.bf16.gmra.mrb[0].mxu0 %v1865
      %v1957 = vpop.f32.mrb[0].mxu0
      %v1958 = vadd.f32 0.0, %v1957
      %v1959 = vpop.f32.mrb[0].mxu0
      %v1960 = vpop.f32.mrb[0].mxu0
      %v1961 = vadd.f32 0.0, %v1960
      %v1962 = vpop.f32.mrb[0].mxu0
      %1963 = vdwg.mxu0
      %v1964 = vadd.f32 %v1708, %v1902
      %v1965 = vadd.f32 %v1711, %v1905
      %v1966 = vadd.f32 %v1716, %v1910
      %v1967 = vadd.f32 %v1719, %v1913
      %v1968 = vadd.f32 %v1724, %v1918
      %v1969 = vadd.f32 %v1727, %v1921
      %v1970 = vadd.f32 %v1732, %v1926
      %v1971 = vadd.f32 %v1735, %v1929
      %v1972 = vadd.f32 %v1740, %v1934
      %v1973 = vadd.f32 %v1743, %v1937
      %v1974 = vadd.f32 %v1748, %v1942
      %v1975 = vadd.f32 %v1751, %v1945
      %v1976 = vadd.f32 %v1756, %v1950
      %v1977 = vadd.f32 %v1759, %v1953
      %v1978 = vadd.f32 %v1764, %v1958
      %v1979 = vadd.f32 %v1767, %v1961
      %v1980 = vld [vmem:[%s609] sm:$0xf]
      %v1981 = vld [vmem:[%s609 + $0x4] sm:$0xf]
      %v1982 = vld [vmem:[%s609 + $0x8] sm:$0xf]
      %v1983 = vld [vmem:[%s609 + $0xc] sm:$0xf]
      %v1984 = vld [vmem:[%s609 + $0x10] sm:$0xf]
      %v1985 = vld [vmem:[%s609 + $0x14] sm:$0xf]
      %v1986 = vld [vmem:[%s609 + $0x18] sm:$0xf]
      %v1987 = vld [vmem:[%s609 + $0x1c] sm:$0xf]
      %v1988 = vld [vmem:[%s609 + $0x20] sm:$0xf]
      %v1989 = vld [vmem:[%s609 + $0x24] sm:$0xf]
      %v1990 = vld [vmem:[%s609 + $0x28] sm:$0xf]
      %v1991 = vld [vmem:[%s609 + $0x2c] sm:$0xf]
      %v1992 = vld [vmem:[%s609 + $0x30] sm:$0xf]
      %v1993 = vld [vmem:[%s609 + $0x34] sm:$0xf]
      %v1994 = vld [vmem:[%s609 + $0x38] sm:$0xf]
      %v1995 = vld [vmem:[%s609 + $0x3c] sm:$0xf]
      %v1996 = vld [vmem:[%s10] sm:$0xf]
      %v1997 = vld [vmem:[%s10 + $0x4] sm:$0xf]
      %v1998 = vld [vmem:[%s10 + $0x8] sm:$0xf]
      %v1999 = vld [vmem:[%s10 + $0xc] sm:$0xf]
      %v2016 = vunpack.c.l.b16 %v1980
      %v2017 = vunpack.c.l.b16 %v1981
      %v2018 = vunpack.c.l.b16 %v1982
      %v2019 = vunpack.c.l.b16 %v1983
      %v2020 = vunpack.c.l.b16 %v1984
      %v2021 = vunpack.c.l.b16 %v1985
      %v2022 = vunpack.c.l.b16 %v1986
      %v2023 = vunpack.c.l.b16 %v1987
      %v2024 = vunpack.c.l.b16 %v1988
      %v2025 = vunpack.c.l.b16 %v1989
      %v2026 = vunpack.c.l.b16 %v1990
      %v2027 = vunpack.c.l.b16 %v1991
      %v2028 = vunpack.c.l.b16 %v1992
      %v2029 = vunpack.c.l.b16 %v1993
      %v2030 = vunpack.c.l.b16 %v1994
      %v2031 = vunpack.c.l.b16 %v1995
      %v2032 = vpack.c.b16 %v2017, %v2016
      %v2033 = vpack.c.b16 %v2019, %v2018
      %v2034 = vpack.c.b16 %v2021, %v2020
      %v2035 = vpack.c.b16 %v2023, %v2022
      %v2036 = vpack.c.b16 %v2025, %v2024
      %v2037 = vpack.c.b16 %v2027, %v2026
      %v2038 = vpack.c.b16 %v2029, %v2028
      %v2039 = vpack.c.b16 %v2031, %v2030
      %v2044 = vunpack.c.l.b16 %v1996
      %v2045 = vunpack.c.l.b16 %v1997
      %v2046 = vunpack.c.l.b16 %v1998
      %v2047 = vunpack.c.l.b16 %v1999
      %v2048 = vpack.c.b16 %v2045, %v2044
      %v2049 = vpack.c.b16 %v2047, %v2046
      %v2053 = vsel %vm1842, %v2032, 0
      %v2056 = vsel %vm1842, %v2033, 0
      %v2059 = vsel %vm1842, %v2034, 0
      %v2062 = vsel %vm1842, %v2035, 0
      %v2065 = vsel %vm1842, %v2036, 0
      %v2068 = vsel %vm1842, %v2037, 0
      %v2071 = vsel %vm1842, %v2038, 0
      %v2074 = vsel %vm1842, %v2039, 0
      %2076 = vmatprep.subr.bf16.mxu0 0
      %2077 = vmatpush1.bf16.msra.mxu0 %v2048
      %2078 = vmatprep.subr.bf16.mxu0 0
      %2079 = vmatpush1.bf16.msra.mxu0 %v2049
      %2080 = vmatprep.subr.bf16.mxu0 0
      %2081 = vmatpush1.bf16.msra.mxu0 0
      %2082 = vmatprep.subr.bf16.mxu0 0
      %2083 = vmatpush1.bf16.msra.mxu0 0
      %2084 = vmatprep.subr.bf16.mxu0 0
      %2085 = vmatpush1.bf16.msra.mxu0 0
      %2086 = vmatprep.subr.bf16.mxu0 0
      %2087 = vmatpush1.bf16.msra.mxu0 0
      %2088 = vmatprep.subr.bf16.mxu0 0
      %2089 = vmatpush1.bf16.msra.mxu0 0
      %2090 = vmatprep.subr.bf16.mxu0 0
      %2091 = vmatpush1.bf16.msra.mxu0 0
      %2092 = vmatprep.subr.bf16.mxu0 0
      %2093 = vmatpush1.bf16.msra.mxu0 0
      %2094 = vmatprep.subr.bf16.mxu0 0
      %2095 = vmatpush1.bf16.msra.mxu0 0
      %2096 = vmatprep.subr.bf16.mxu0 0
      %2097 = vmatpush1.bf16.msra.mxu0 0
      %2098 = vmatprep.subr.bf16.mxu0 0
      %2099 = vmatpush1.bf16.msra.mxu0 0
      %2100 = vmatprep.subr.bf16.mxu0 0
      %2101 = vmatpush1.bf16.msra.mxu0 0
      %2102 = vmatprep.subr.bf16.mxu0 0
      %2103 = vmatpush1.bf16.msra.mxu0 0
      %2104 = vmatprep.subr.bf16.mxu0 0
      %2105 = vmatpush1.bf16.msra.mxu0 0
      %2106 = vmatprep.subr.bf16.mxu0 0
      %2107 = vmatpush1.bf16.msra.mxu0 0
      %2108 = vmatprep.mubr.bf16.mxu0 0
      %2109 = vmatmul.mubr.bf16.gmra.mrb[0].mxu0 %v2053
      %v2110 = vpop.f32.mrb[0].mxu0
      %v2111 = vadd.f32 0.0, %v2110
      %v2112 = vpop.f32.mrb[0].mxu0
      %v2113 = vpop.f32.mrb[0].mxu0
      %v2114 = vadd.f32 0.0, %v2113
      %v2115 = vpop.f32.mrb[0].mxu0
      %2116 = vmatprep.mubr.bf16.mxu0 0
      %2117 = vmatmul.mubr.bf16.gmra.mrb[0].mxu0 %v2056
      %v2118 = vpop.f32.mrb[0].mxu0
      %v2119 = vadd.f32 0.0, %v2118
      %v2120 = vpop.f32.mrb[0].mxu0
      %v2121 = vpop.f32.mrb[0].mxu0
      %v2122 = vadd.f32 0.0, %v2121
      %v2123 = vpop.f32.mrb[0].mxu0
      %2124 = vmatprep.mubr.bf16.mxu0 0
      %2125 = vmatmul.mubr.bf16.gmra.mrb[0].mxu0 %v2059
      %v2126 = vpop.f32.mrb[0].mxu0
      %v2127 = vadd.f32 0.0, %v2126
      %v2128 = vpop.f32.mrb[0].mxu0
      %v2129 = vpop.f32.mrb[0].mxu0
      %v2130 = vadd.f32 0.0, %v2129
      %v2131 = vpop.f32.mrb[0].mxu0
      %2132 = vmatprep.mubr.bf16.mxu0 0
      %2133 = vmatmul.mubr.bf16.gmra.mrb[0].mxu0 %v2062
      %v2134 = vpop.f32.mrb[0].mxu0
      %v2135 = vadd.f32 0.0, %v2134
      %v2136 = vpop.f32.mrb[0].mxu0
      %v2137 = vpop.f32.mrb[0].mxu0
      %v2138 = vadd.f32 0.0, %v2137
      %v2139 = vpop.f32.mrb[0].mxu0
      %2140 = vmatprep.mubr.bf16.mxu0 0
      %2141 = vmatmul.mubr.bf16.gmra.mrb[0].mxu0 %v2065
      %v2142 = vpop.f32.mrb[0].mxu0
      %v2143 = vadd.f32 0.0, %v2142
      %v2144 = vpop.f32.mrb[0].mxu0
      %v2145 = vpop.f32.mrb[0].mxu0
      %v2146 = vadd.f32 0.0, %v2145
      %v2147 = vpop.f32.mrb[0].mxu0
      %2148 = vmatprep.mubr.bf16.mxu0 0
      %2149 = vmatmul.mubr.bf16.gmra.mrb[0].mxu0 %v2068
      %v2150 = vpop.f32.mrb[0].mxu0
      %v2151 = vadd.f32 0.0, %v2150
      %v2152 = vpop.f32.mrb[0].mxu0
      %v2153 = vpop.f32.mrb[0].mxu0
      %v2154 = vadd.f32 0.0, %v2153
      %v2155 = vpop.f32.mrb[0].mxu0
      %2156 = vmatprep.mubr.bf16.mxu0 0
      %2157 = vmatmul.mubr.bf16.gmra.mrb[0].mxu0 %v2071
      %v2158 = vpop.f32.mrb[0].mxu0
      %v2159 = vadd.f32 0.0, %v2158
      %v2160 = vpop.f32.mrb[0].mxu0
      %v2161 = vpop.f32.mrb[0].mxu0
      %v2162 = vadd.f32 0.0, %v2161
      %v2163 = vpop.f32.mrb[0].mxu0
      %2164 = vmatprep.mubr.bf16.mxu0 0
      %2165 = vmatmul.mubr.bf16.gmra.mrb[0].mxu0 %v2074
      %v2166 = vpop.f32.mrb[0].mxu0
      %v2167 = vadd.f32 0.0, %v2166
      %v2168 = vpop.f32.mrb[0].mxu0
      %v2169 = vpop.f32.mrb[0].mxu0
      %v2170 = vadd.f32 0.0, %v2169
      %v2171 = vpop.f32.mrb[0].mxu0
      %2172 = vdwg.mxu0
      %v2173 = vadd.f32 %v1964, %v2111
      %v2174 = vadd.f32 %v1965, %v2114
      %v2175 = vadd.f32 %v1966, %v2119
      %v2176 = vadd.f32 %v1967, %v2122
      %v2177 = vadd.f32 %v1968, %v2127
      %v2178 = vadd.f32 %v1969, %v2130
      %v2179 = vadd.f32 %v1970, %v2135
      %v2180 = vadd.f32 %v1971, %v2138
      %v2181 = vadd.f32 %v1972, %v2143
      %v2182 = vadd.f32 %v1973, %v2146
      %v2183 = vadd.f32 %v1974, %v2151
      %v2184 = vadd.f32 %v1975, %v2154
      %v2185 = vadd.f32 %v1976, %v2159
      %v2186 = vadd.f32 %v1977, %v2162
      %v2187 = vadd.f32 %v1978, %v2167
      %v2188 = vadd.f32 %v1979, %v2170
      %v2189 = vld [vmem:[%s628] sm:$0xf]
      %v2190 = vld [vmem:[%s628 + $0x4] sm:$0xf]
      %v2191 = vld [vmem:[%s628 + $0x8] sm:$0xf]
      %v2192 = vld [vmem:[%s628 + $0xc] sm:$0xf]
      %v2193 = vld [vmem:[%s628 + $0x10] sm:$0xf]
      %v2194 = vld [vmem:[%s628 + $0x14] sm:$0xf]
      %v2195 = vld [vmem:[%s628 + $0x18] sm:$0xf]
      %v2196 = vld [vmem:[%s628 + $0x1c] sm:$0xf]
      %v2197 = vld [vmem:[%s628 + $0x20] sm:$0xf]
      %v2198 = vld [vmem:[%s628 + $0x24] sm:$0xf]
      %v2199 = vld [vmem:[%s628 + $0x28] sm:$0xf]
      %v2200 = vld [vmem:[%s628 + $0x2c] sm:$0xf]
      %v2201 = vld [vmem:[%s628 + $0x30] sm:$0xf]
      %v2202 = vld [vmem:[%s628 + $0x34] sm:$0xf]
      %v2203 = vld [vmem:[%s628 + $0x38] sm:$0xf]
      %v2204 = vld [vmem:[%s628 + $0x3c] sm:$0xf]
      %v2205 = vld [vmem:[%s13] sm:$0xf]
      %v2206 = vld [vmem:[%s13 + $0x4] sm:$0xf]
      %v2207 = vld [vmem:[%s13 + $0x8] sm:$0xf]
      %v2208 = vld [vmem:[%s13 + $0xc] sm:$0xf]
      %v2225 = vunpack.c.l.b16 %v2189
      %v2226 = vunpack.c.l.b16 %v2190
      %v2227 = vunpack.c.l.b16 %v2191
      %v2228 = vunpack.c.l.b16 %v2192
      %v2229 = vunpack.c.l.b16 %v2193
      %v2230 = vunpack.c.l.b16 %v2194
      %v2231 = vunpack.c.l.b16 %v2195
      %v2232 = vunpack.c.l.b16 %v2196
      %v2233 = vunpack.c.l.b16 %v2197
      %v2234 = vunpack.c.l.b16 %v2198
      %v2235 = vunpack.c.l.b16 %v2199
      %v2236 = vunpack.c.l.b16 %v2200
      %v2237 = vunpack.c.l.b16 %v2201
      %v2238 = vunpack.c.l.b16 %v2202
      %v2239 = vunpack.c.l.b16 %v2203
      %v2240 = vunpack.c.l.b16 %v2204
      %v2241 = vpack.c.b16 %v2226, %v2225
      %v2242 = vpack.c.b16 %v2228, %v2227
      %v2243 = vpack.c.b16 %v2230, %v2229
      %v2244 = vpack.c.b16 %v2232, %v2231
      %v2245 = vpack.c.b16 %v2234, %v2233
      %v2246 = vpack.c.b16 %v2236, %v2235
      %v2247 = vpack.c.b16 %v2238, %v2237
      %v2248 = vpack.c.b16 %v2240, %v2239
      %v2253 = vunpack.c.l.b16 %v2205
      %v2254 = vunpack.c.l.b16 %v2206
      %v2255 = vunpack.c.l.b16 %v2207
      %v2256 = vunpack.c.l.b16 %v2208
      %v2257 = vpack.c.b16 %v2254, %v2253
      %v2258 = vpack.c.b16 %v2256, %v2255
      %v2262 = vsel %vm1842, %v2241, 0
      %v2265 = vsel %vm1842, %v2242, 0
      %v2268 = vsel %vm1842, %v2243, 0
      %v2271 = vsel %vm1842, %v2244, 0
      %v2274 = vsel %vm1842, %v2245, 0
      %v2277 = vsel %vm1842, %v2246, 0
      %v2280 = vsel %vm1842, %v2247, 0
      %v2283 = vsel %vm1842, %v2248, 0
      %2285 = vmatprep.subr.bf16.mxu0 0
      %2286 = vmatpush1.bf16.msra.mxu0 %v2257
      %2287 = vmatprep.subr.bf16.mxu0 0
      %2288 = vmatpush1.bf16.msra.mxu0 %v2258
      %2289 = vmatprep.subr.bf16.mxu0 0
      %2290 = vmatpush1.bf16.msra.mxu0 0
      %2291 = vmatprep.subr.bf16.mxu0 0
      %2292 = vmatpush1.bf16.msra.mxu0 0
      %2293 = vmatprep.subr.bf16.mxu0 0
      %2294 = vmatpush1.bf16.msra.mxu0 0
      %2295 = vmatprep.subr.bf16.mxu0 0
      %2296 = vmatpush1.bf16.msra.mxu0 0
      %2297 = vmatprep.subr.bf16.mxu0 0
      %2298 = vmatpush1.bf16.msra.mxu0 0
      %2299 = vmatprep.subr.bf16.mxu0 0
      %2300 = vmatpush1.bf16.msra.mxu0 0
      %2301 = vmatprep.subr.bf16.mxu0 0
      %2302 = vmatpush1.bf16.msra.mxu0 0
      %2303 = vmatprep.subr.bf16.mxu0 0
      %2304 = vmatpush1.bf16.msra.mxu0 0
      %2305 = vmatprep.subr.bf16.mxu0 0
      %2306 = vmatpush1.bf16.msra.mxu0 0
      %2307 = vmatprep.subr.bf16.mxu0 0
      %2308 = vmatpush1.bf16.msra.mxu0 0
      %2309 = vmatprep.subr.bf16.mxu0 0
      %2310 = vmatpush1.bf16.msra.mxu0 0
      %2311 = vmatprep.subr.bf16.mxu0 0
      %2312 = vmatpush1.bf16.msra.mxu0 0
      %2313 = vmatprep.subr.bf16.mxu0 0
      %2314 = vmatpush1.bf16.msra.mxu0 0
      %2315 = vmatprep.subr.bf16.mxu0 0
      %2316 = vmatpush1.bf16.msra.mxu0 0
      %2317 = vmatprep.mubr.bf16.mxu0 0
      %2318 = vmatmul.mubr.bf16.gmra.mrb[0].mxu0 %v2262
      %v2319 = vpop.f32.mrb[0].mxu0
      %v2320 = vadd.f32 0.0, %v2319
      %v2321 = vpop.f32.mrb[0].mxu0
      %v2322 = vpop.f32.mrb[0].mxu0
      %v2323 = vadd.f32 0.0, %v2322
      %v2324 = vpop.f32.mrb[0].mxu0
      %2325 = vmatprep.mubr.bf16.mxu0 0
      %2326 = vmatmul.mubr.bf16.gmra.mrb[0].mxu0 %v2265
      %v2327 = vpop.f32.mrb[0].mxu0
      %v2328 = vadd.f32 0.0, %v2327
      %v2329 = vpop.f32.mrb[0].mxu0
      %v2330 = vpop.f32.mrb[0].mxu0
      %v2331 = vadd.f32 0.0, %v2330
      %v2332 = vpop.f32.mrb[0].mxu0
      %2333 = vmatprep.mubr.bf16.mxu0 0
      %2334 = vmatmul.mubr.bf16.gmra.mrb[0].mxu0 %v2268
      %v2335 = vpop.f32.mrb[0].mxu0
      %v2336 = vadd.f32 0.0, %v2335
      %v2337 = vpop.f32.mrb[0].mxu0
      %v2338 = vpop.f32.mrb[0].mxu0
      %v2339 = vadd.f32 0.0, %v2338
      %v2340 = vpop.f32.mrb[0].mxu0
      %2341 = vmatprep.mubr.bf16.mxu0 0
      %2342 = vmatmul.mubr.bf16.gmra.mrb[0].mxu0 %v2271
      %v2343 = vpop.f32.mrb[0].mxu0
      %v2344 = vadd.f32 0.0, %v2343
      %v2345 = vpop.f32.mrb[0].mxu0
      %v2346 = vpop.f32.mrb[0].mxu0
      %v2347 = vadd.f32 0.0, %v2346
      %v2348 = vpop.f32.mrb[0].mxu0
      %2349 = vmatprep.mubr.bf16.mxu0 0
      %2350 = vmatmul.mubr.bf16.gmra.mrb[0].mxu0 %v2274
      %v2351 = vpop.f32.mrb[0].mxu0
      %v2352 = vadd.f32 0.0, %v2351
      %v2353 = vpop.f32.mrb[0].mxu0
      %v2354 = vpop.f32.mrb[0].mxu0
      %v2355 = vadd.f32 0.0, %v2354
      %v2356 = vpop.f32.mrb[0].mxu0
      %2357 = vmatprep.mubr.bf16.mxu0 0
      %2358 = vmatmul.mubr.bf16.gmra.mrb[0].mxu0 %v2277
      %v2359 = vpop.f32.mrb[0].mxu0
      %v2360 = vadd.f32 0.0, %v2359
      %v2361 = vpop.f32.mrb[0].mxu0
      %v2362 = vpop.f32.mrb[0].mxu0
      %v2363 = vadd.f32 0.0, %v2362
      %v2364 = vpop.f32.mrb[0].mxu0
      %2365 = vmatprep.mubr.bf16.mxu0 0
      %2366 = vmatmul.mubr.bf16.gmra.mrb[0].mxu0 %v2280
      %v2367 = vpop.f32.mrb[0].mxu0
      %v2368 = vadd.f32 0.0, %v2367
      %v2369 = vpop.f32.mrb[0].mxu0
      %v2370 = vpop.f32.mrb[0].mxu0
      %v2371 = vadd.f32 0.0, %v2370
      %v2372 = vpop.f32.mrb[0].mxu0
      %2373 = vmatprep.mubr.bf16.mxu0 0
      %2374 = vmatmul.mubr.bf16.gmra.mrb[0].mxu0 %v2283
      %v2375 = vpop.f32.mrb[0].mxu0
      %v2376 = vadd.f32 0.0, %v2375
      %v2377 = vpop.f32.mrb[0].mxu0
      %v2378 = vpop.f32.mrb[0].mxu0
      %v2379 = vadd.f32 0.0, %v2378
      %v2380 = vpop.f32.mrb[0].mxu0
      %2381 = vdwg.mxu0
      %v2382 = vadd.f32 %v2173, %v2320
      %v2383 = vadd.f32 %v2174, %v2323
      %v2384 = vadd.f32 %v2175, %v2328
      %v2385 = vadd.f32 %v2176, %v2331
      %v2386 = vadd.f32 %v2177, %v2336
      %v2387 = vadd.f32 %v2178, %v2339
      %v2388 = vadd.f32 %v2179, %v2344
      %v2389 = vadd.f32 %v2180, %v2347
      %v2390 = vadd.f32 %v2181, %v2352
      %v2391 = vadd.f32 %v2182, %v2355
      %v2392 = vadd.f32 %v2183, %v2360
      %v2393 = vadd.f32 %v2184, %v2363
      %v2394 = vadd.f32 %v2185, %v2368
      %v2395 = vadd.f32 %v2186, %v2371
      %v2396 = vadd.f32 %v2187, %v2376
      %v2397 = vadd.f32 %v2188, %v2379
      %v2398 = vld [vmem:[%s603] sm:$0xf]
      %v2399 = vld [vmem:[%s603 + $0x4] sm:$0xf]
      %v2400 = vld [vmem:[%s603 + $0x8] sm:$0xf]
      %v2401 = vld [vmem:[%s603 + $0xc] sm:$0xf]
      %v2402 = vld [vmem:[%s603 + $0x10] sm:$0xf]
      %v2403 = vld [vmem:[%s603 + $0x14] sm:$0xf]
      %v2404 = vld [vmem:[%s603 + $0x18] sm:$0xf]
      %v2405 = vld [vmem:[%s603 + $0x1c] sm:$0xf]
      %v2406 = vld [vmem:[%s603 + $0x20] sm:$0xf]
      %v2407 = vld [vmem:[%s603 + $0x24] sm:$0xf]
      %v2408 = vld [vmem:[%s603 + $0x28] sm:$0xf]
      %v2409 = vld [vmem:[%s603 + $0x2c] sm:$0xf]
      %v2410 = vld [vmem:[%s603 + $0x30] sm:$0xf]
      %v2411 = vld [vmem:[%s603 + $0x34] sm:$0xf]
      %v2412 = vld [vmem:[%s603 + $0x38] sm:$0xf]
      %v2413 = vld [vmem:[%s603 + $0x3c] sm:$0xf]
      %v2414 = vld [vmem:[%s9] sm:$0xf]
      %v2415 = vld [vmem:[%s9 + $0x4] sm:$0x1]
      %v2432 = vunpack.c.l.b16 %v2398
      %v2433 = vunpack.c.l.b16 %v2399
      %v2434 = vunpack.c.l.b16 %v2400
      %v2435 = vunpack.c.l.b16 %v2401
      %v2436 = vunpack.c.l.b16 %v2402
      %v2437 = vunpack.c.l.b16 %v2403
      %v2438 = vunpack.c.l.b16 %v2404
      %v2439 = vunpack.c.l.b16 %v2405
      %v2440 = vunpack.c.l.b16 %v2406
      %v2441 = vunpack.c.l.b16 %v2407
      %v2442 = vunpack.c.l.b16 %v2408
      %v2443 = vunpack.c.l.b16 %v2409
      %v2444 = vunpack.c.l.b16 %v2410
      %v2445 = vunpack.c.l.b16 %v2411
      %v2446 = vunpack.c.l.b16 %v2412
      %v2447 = vunpack.c.l.b16 %v2413
      %v2448 = vpack.c.b16 %v2433, %v2432
      %v2449 = vpack.c.b16 %v2435, %v2434
      %v2450 = vpack.c.b16 %v2437, %v2436
      %v2451 = vpack.c.b16 %v2439, %v2438
      %v2452 = vpack.c.b16 %v2441, %v2440
      %v2453 = vpack.c.b16 %v2443, %v2442
      %v2454 = vpack.c.b16 %v2445, %v2444
      %v2455 = vpack.c.b16 %v2447, %v2446
      %v2458 = vunpack.c.l.b16 %v2414
      %v2459 = vunpack.c.l.b16 %v2415
      %v2460 = vpack.c.b16 %v2459, %v2458
      %vm2461 = vcmask 80896
      %v2463 = vsel %vm2461, %v2448, 0
      %v2466 = vsel %vm2461, %v2449, 0
      %v2469 = vsel %vm2461, %v2450, 0
      %v2472 = vsel %vm2461, %v2451, 0
      %v2475 = vsel %vm2461, %v2452, 0
      %v2478 = vsel %vm2461, %v2453, 0
      %v2481 = vsel %vm2461, %v2454, 0
      %v2484 = vsel %vm2461, %v2455, 0
      %vm2486 = vcmask 1044480
      %v2488 = vsel %vm2486, %v2460, 0
      %2490 = vmatprep.subr.bf16.mxu0 0
      %2491 = vmatpush1.bf16.msra.mxu0 %v2488
      %2492 = vmatprep.subr.bf16.mxu0 0
      %2493 = vmatpush1.bf16.msra.mxu0 0
      %2494 = vmatprep.subr.bf16.mxu0 0
      %2495 = vmatpush1.bf16.msra.mxu0 0
      %2496 = vmatprep.subr.bf16.mxu0 0
      %2497 = vmatpush1.bf16.msra.mxu0 0
      %2498 = vmatprep.subr.bf16.mxu0 0
      %2499 = vmatpush1.bf16.msra.mxu0 0
      %2500 = vmatprep.subr.bf16.mxu0 0
      %2501 = vmatpush1.bf16.msra.mxu0 0
      %2502 = vmatprep.subr.bf16.mxu0 0
      %2503 = vmatpush1.bf16.msra.mxu0 0
      %2504 = vmatprep.subr.bf16.mxu0 0
      %2505 = vmatpush1.bf16.msra.mxu0 0
      %2506 = vmatprep.subr.bf16.mxu0 0
      %2507 = vmatpush1.bf16.msra.mxu0 0
      %2508 = vmatprep.subr.bf16.mxu0 0
      %2509 = vmatpush1.bf16.msra.mxu0 0
      %2510 = vmatprep.subr.bf16.mxu0 0
      %2511 = vmatpush1.bf16.msra.mxu0 0
      %2512 = vmatprep.subr.bf16.mxu0 0
      %2513 = vmatpush1.bf16.msra.mxu0 0
      %2514 = vmatprep.subr.bf16.mxu0 0
      %2515 = vmatpush1.bf16.msra.mxu0 0
      %2516 = vmatprep.subr.bf16.mxu0 0
      %2517 = vmatpush1.bf16.msra.mxu0 0
      %2518 = vmatprep.subr.bf16.mxu0 0
      %2519 = vmatpush1.bf16.msra.mxu0 0
      %2520 = vmatprep.subr.bf16.mxu0 0
      %2521 = vmatpush1.bf16.msra.mxu0 0
      %2522 = vmatprep.mubr.bf16.mxu0 0
      %2523 = vmatmul.mubr.bf16.gmra.mrb[0].mxu0 %v2463
      %v2524 = vpop.f32.mrb[0].mxu0
      %v2525 = vadd.f32 0.0, %v2524
      %v2526 = vpop.f32.mrb[0].mxu0
      %v2527 = vpop.f32.mrb[0].mxu0
      %v2528 = vadd.f32 0.0, %v2527
      %v2529 = vpop.f32.mrb[0].mxu0
      %2530 = vmatprep.mubr.bf16.mxu0 0
      %2531 = vmatmul.mubr.bf16.gmra.mrb[0].mxu0 %v2466
      %v2532 = vpop.f32.mrb[0].mxu0
      %v2533 = vadd.f32 0.0, %v2532
      %v2534 = vpop.f32.mrb[0].mxu0
      %v2535 = vpop.f32.mrb[0].mxu0
      %v2536 = vadd.f32 0.0, %v2535
      %v2537 = vpop.f32.mrb[0].mxu0
      %2538 = vmatprep.mubr.bf16.mxu0 0
      %2539 = vmatmul.mubr.bf16.gmra.mrb[0].mxu0 %v2469
      %v2540 = vpop.f32.mrb[0].mxu0
      %v2541 = vadd.f32 0.0, %v2540
      %v2542 = vpop.f32.mrb[0].mxu0
      %v2543 = vpop.f32.mrb[0].mxu0
      %v2544 = vadd.f32 0.0, %v2543
      %v2545 = vpop.f32.mrb[0].mxu0
      %2546 = vmatprep.mubr.bf16.mxu0 0
      %2547 = vmatmul.mubr.bf16.gmra.mrb[0].mxu0 %v2472
      %v2548 = vpop.f32.mrb[0].mxu0
      %v2549 = vadd.f32 0.0, %v2548
      %v2550 = vpop.f32.mrb[0].mxu0
      %v2551 = vpop.f32.mrb[0].mxu0
      %v2552 = vadd.f32 0.0, %v2551
      %v2553 = vpop.f32.mrb[0].mxu0
      %2554 = vmatprep.mubr.bf16.mxu0 0
      %2555 = vmatmul.mubr.bf16.gmra.mrb[0].mxu0 %v2475
      %v2556 = vpop.f32.mrb[0].mxu0
      %v2557 = vadd.f32 0.0, %v2556
      %v2558 = vpop.f32.mrb[0].mxu0
      %v2559 = vpop.f32.mrb[0].mxu0
      %v2560 = vadd.f32 0.0, %v2559
      %v2561 = vpop.f32.mrb[0].mxu0
      %2562 = vmatprep.mubr.bf16.mxu0 0
      %2563 = vmatmul.mubr.bf16.gmra.mrb[0].mxu0 %v2478
      %v2564 = vpop.f32.mrb[0].mxu0
      %v2565 = vadd.f32 0.0, %v2564
      %v2566 = vpop.f32.mrb[0].mxu0
      %v2567 = vpop.f32.mrb[0].mxu0
      %v2568 = vadd.f32 0.0, %v2567
      %v2569 = vpop.f32.mrb[0].mxu0
      %2570 = vmatprep.mubr.bf16.mxu0 0
      %2571 = vmatmul.mubr.bf16.gmra.mrb[0].mxu0 %v2481
      %v2572 = vpop.f32.mrb[0].mxu0
      %v2573 = vadd.f32 0.0, %v2572
      %v2574 = vpop.f32.mrb[0].mxu0
      %v2575 = vpop.f32.mrb[0].mxu0
      %v2576 = vadd.f32 0.0, %v2575
      %v2577 = vpop.f32.mrb[0].mxu0
      %2578 = vmatprep.mubr.bf16.mxu0 0
      %2579 = vmatmul.mubr.bf16.gmra.mrb[0].mxu0 %v2484
      %v2580 = vpop.f32.mrb[0].mxu0
      %v2581 = vadd.f32 0.0, %v2580
      %v2582 = vpop.f32.mrb[0].mxu0
      %v2583 = vpop.f32.mrb[0].mxu0
      %v2584 = vadd.f32 0.0, %v2583
      %v2585 = vpop.f32.mrb[0].mxu0
      %2586 = vdwg.mxu0
      %v2587 = vadd.f32 %v2382, %v2525
      %v2588 = vadd.f32 %v2383, %v2528
      %v2589 = vadd.f32 %v2384, %v2533
      %v2590 = vadd.f32 %v2385, %v2536
      %v2591 = vadd.f32 %v2386, %v2541
      %v2592 = vadd.f32 %v2387, %v2544
      %v2593 = vadd.f32 %v2388, %v2549
      %v2594 = vadd.f32 %v2389, %v2552
      %v2595 = vadd.f32 %v2390, %v2557
      %v2596 = vadd.f32 %v2391, %v2560
      %v2597 = vadd.f32 %v2392, %v2565
      %v2598 = vadd.f32 %v2393, %v2568
      %v2599 = vadd.f32 %v2394, %v2573
      %v2600 = vadd.f32 %v2395, %v2576
      %v2601 = vadd.f32 %v2396, %v2581
      %v2602 = vadd.f32 %v2397, %v2584
      %v2603 = vld [vmem:[%s622] sm:$0xf]
      %v2604 = vld [vmem:[%s622 + $0x4] sm:$0xf]
      %v2605 = vld [vmem:[%s622 + $0x8] sm:$0xf]
      %v2606 = vld [vmem:[%s622 + $0xc] sm:$0xf]
      %v2607 = vld [vmem:[%s622 + $0x10] sm:$0xf]
      %v2608 = vld [vmem:[%s622 + $0x14] sm:$0xf]
      %v2609 = vld [vmem:[%s622 + $0x18] sm:$0xf]
      %v2610 = vld [vmem:[%s622 + $0x1c] sm:$0xf]
      %v2611 = vld [vmem:[%s622 + $0x20] sm:$0xf]
      %v2612 = vld [vmem:[%s622 + $0x24] sm:$0xf]
      %v2613 = vld [vmem:[%s622 + $0x28] sm:$0xf]
      %v2614 = vld [vmem:[%s622 + $0x2c] sm:$0xf]
      %v2615 = vld [vmem:[%s622 + $0x30] sm:$0xf]
      %v2616 = vld [vmem:[%s622 + $0x34] sm:$0xf]
      %v2617 = vld [vmem:[%s622 + $0x38] sm:$0xf]
      %v2618 = vld [vmem:[%s622 + $0x3c] sm:$0xf]
      %v2619 = vld [vmem:[%s12] sm:$0xf]
      %v2620 = vld [vmem:[%s12 + $0x4] sm:$0x1]
      %v2637 = vunpack.c.l.b16 %v2603
      %v2638 = vunpack.c.l.b16 %v2604
      %v2639 = vunpack.c.l.b16 %v2605
      %v2640 = vunpack.c.l.b16 %v2606
      %v2641 = vunpack.c.l.b16 %v2607
      %v2642 = vunpack.c.l.b16 %v2608
      %v2643 = vunpack.c.l.b16 %v2609
      %v2644 = vunpack.c.l.b16 %v2610
      %v2645 = vunpack.c.l.b16 %v2611
      %v2646 = vunpack.c.l.b16 %v2612
      %v2647 = vunpack.c.l.b16 %v2613
      %v2648 = vunpack.c.l.b16 %v2614
      %v2649 = vunpack.c.l.b16 %v2615
      %v2650 = vunpack.c.l.b16 %v2616
      %v2651 = vunpack.c.l.b16 %v2617
      %v2652 = vunpack.c.l.b16 %v2618
      %v2653 = vpack.c.b16 %v2638, %v2637
      %v2654 = vpack.c.b16 %v2640, %v2639
      %v2655 = vpack.c.b16 %v2642, %v2641
      %v2656 = vpack.c.b16 %v2644, %v2643
      %v2657 = vpack.c.b16 %v2646, %v2645
      %v2658 = vpack.c.b16 %v2648, %v2647
      %v2659 = vpack.c.b16 %v2650, %v2649
      %v2660 = vpack.c.b16 %v2652, %v2651
      %v2663 = vunpack.c.l.b16 %v2619
      %v2664 = vunpack.c.l.b16 %v2620
      %v2665 = vpack.c.b16 %v2664, %v2663
      %v2667 = vsel %vm2461, %v2653, 0
      %v2670 = vsel %vm2461, %v2654, 0
      %v2673 = vsel %vm2461, %v2655, 0
      %v2676 = vsel %vm2461, %v2656, 0
      %v2679 = vsel %vm2461, %v2657, 0
      %v2682 = vsel %vm2461, %v2658, 0
      %v2685 = vsel %vm2461, %v2659, 0
      %v2688 = vsel %vm2461, %v2660, 0
      %v2691 = vsel %vm2486, %v2665, 0
      %2693 = vmatprep.subr.bf16.mxu0 0
      %2694 = vmatpush1.bf16.msra.mxu0 %v2691
      %2695 = vmatprep.subr.bf16.mxu0 0
      %2696 = vmatpush1.bf16.msra.mxu0 0
      %2697 = vmatprep.subr.bf16.mxu0 0
      %2698 = vmatpush1.bf16.msra.mxu0 0
      %2699 = vmatprep.subr.bf16.mxu0 0
      %2700 = vmatpush1.bf16.msra.mxu0 0
      %2701 = vmatprep.subr.bf16.mxu0 0
      %2702 = vmatpush1.bf16.msra.mxu0 0
      %2703 = vmatprep.subr.bf16.mxu0 0
      %2704 = vmatpush1.bf16.msra.mxu0 0
      %2705 = vmatprep.subr.bf16.mxu0 0
      %2706 = vmatpush1.bf16.msra.mxu0 0
      %2707 = vmatprep.subr.bf16.mxu0 0
      %2708 = vmatpush1.bf16.msra.mxu0 0
      %2709 = vmatprep.subr.bf16.mxu0 0
      %2710 = vmatpush1.bf16.msra.mxu0 0
      %2711 = vmatprep.subr.bf16.mxu0 0
      %2712 = vmatpush1.bf16.msra.mxu0 0
      %2713 = vmatprep.subr.bf16.mxu0 0
      %2714 = vmatpush1.bf16.msra.mxu0 0
      %2715 = vmatprep.subr.bf16.mxu0 0
      %2716 = vmatpush1.bf16.msra.mxu0 0
      %2717 = vmatprep.subr.bf16.mxu0 0
      %2718 = vmatpush1.bf16.msra.mxu0 0
      %2719 = vmatprep.subr.bf16.mxu0 0
      %2720 = vmatpush1.bf16.msra.mxu0 0
      %2721 = vmatprep.subr.bf16.mxu0 0
      %2722 = vmatpush1.bf16.msra.mxu0 0
      %2723 = vmatprep.subr.bf16.mxu0 0
      %2724 = vmatpush1.bf16.msra.mxu0 0
      %2725 = vmatprep.mubr.bf16.mxu0 0
      %2726 = vmatmul.mubr.bf16.gmra.mrb[0].mxu0 %v2667
      %v2727 = vpop.f32.mrb[0].mxu0
      %v2728 = vadd.f32 0.0, %v2727
      %v2729 = vpop.f32.mrb[0].mxu0
      %v2730 = vpop.f32.mrb[0].mxu0
      %v2731 = vadd.f32 0.0, %v2730
      %v2732 = vpop.f32.mrb[0].mxu0
      %2733 = vmatprep.mubr.bf16.mxu0 0
      %2734 = vmatmul.mubr.bf16.gmra.mrb[0].mxu0 %v2670
      %v2735 = vpop.f32.mrb[0].mxu0
      %v2736 = vadd.f32 0.0, %v2735
      %v2737 = vpop.f32.mrb[0].mxu0
      %v2738 = vpop.f32.mrb[0].mxu0
      %v2739 = vadd.f32 0.0, %v2738
      %v2740 = vpop.f32.mrb[0].mxu0
      %2741 = vmatprep.mubr.bf16.mxu0 0
      %2742 = vmatmul.mubr.bf16.gmra.mrb[0].mxu0 %v2673
      %v2743 = vpop.f32.mrb[0].mxu0
      %v2744 = vadd.f32 0.0, %v2743
      %v2745 = vpop.f32.mrb[0].mxu0
      %v2746 = vpop.f32.mrb[0].mxu0
      %v2747 = vadd.f32 0.0, %v2746
      %v2748 = vpop.f32.mrb[0].mxu0
      %2749 = vmatprep.mubr.bf16.mxu0 0
      %2750 = vmatmul.mubr.bf16.gmra.mrb[0].mxu0 %v2676
      %v2751 = vpop.f32.mrb[0].mxu0
      %v2752 = vadd.f32 0.0, %v2751
      %v2753 = vpop.f32.mrb[0].mxu0
      %v2754 = vpop.f32.mrb[0].mxu0
      %v2755 = vadd.f32 0.0, %v2754
      %v2756 = vpop.f32.mrb[0].mxu0
      %2757 = vmatprep.mubr.bf16.mxu0 0
      %2758 = vmatmul.mubr.bf16.gmra.mrb[0].mxu0 %v2679
      %v2759 = vpop.f32.mrb[0].mxu0
      %v2760 = vadd.f32 0.0, %v2759
      %v2761 = vpop.f32.mrb[0].mxu0
      %v2762 = vpop.f32.mrb[0].mxu0
      %v2763 = vadd.f32 0.0, %v2762
      %v2764 = vpop.f32.mrb[0].mxu0
      %2765 = vmatprep.mubr.bf16.mxu0 0
      %2766 = vmatmul.mubr.bf16.gmra.mrb[0].mxu0 %v2682
      %v2767 = vpop.f32.mrb[0].mxu0
      %v2768 = vadd.f32 0.0, %v2767
      %v2769 = vpop.f32.mrb[0].mxu0
      %v2770 = vpop.f32.mrb[0].mxu0
      %v2771 = vadd.f32 0.0, %v2770
      %v2772 = vpop.f32.mrb[0].mxu0
      %2773 = vmatprep.mubr.bf16.mxu0 0
      %2774 = vmatmul.mubr.bf16.gmra.mrb[0].mxu0 %v2685
      %v2775 = vpop.f32.mrb[0].mxu0
      %v2776 = vadd.f32 0.0, %v2775
      %v2777 = vpop.f32.mrb[0].mxu0
      %v2778 = vpop.f32.mrb[0].mxu0
      %v2779 = vadd.f32 0.0, %v2778
      %v2780 = vpop.f32.mrb[0].mxu0
      %2781 = vmatprep.mubr.bf16.mxu0 0
      %2782 = vmatmul.mubr.bf16.gmra.mrb[0].mxu0 %v2688
      %v2783 = vpop.f32.mrb[0].mxu0
      %v2784 = vadd.f32 0.0, %v2783
      %v2785 = vpop.f32.mrb[0].mxu0
      %v2786 = vpop.f32.mrb[0].mxu0
      %v2787 = vadd.f32 0.0, %v2786
      %v2788 = vpop.f32.mrb[0].mxu0
      %2789 = vdwg.mxu0
      %v2790 = vadd.f32 %v2587, %v2728
      %v2791 = vadd.f32 %v2588, %v2731
      %v2792 = vadd.f32 %v2589, %v2736
      %v2793 = vadd.f32 %v2590, %v2739
      %v2794 = vadd.f32 %v2591, %v2744
      %v2795 = vadd.f32 %v2592, %v2747
      %v2796 = vadd.f32 %v2593, %v2752
      %v2797 = vadd.f32 %v2594, %v2755
      %v2798 = vadd.f32 %v2595, %v2760
      %v2799 = vadd.f32 %v2596, %v2763
      %v2800 = vadd.f32 %v2597, %v2768
      %v2801 = vadd.f32 %v2598, %v2771
      %v2802 = vadd.f32 %v2599, %v2776
      %v2803 = vadd.f32 %v2600, %v2779
      %v2804 = vadd.f32 %v2601, %v2784
      %v2805 = vadd.f32 %v2602, %v2787
      %v2806 = vld [vmem:[%s14] sm:$0x1]
      %v2808 = vlaneseq
      %v2809 = vshrl.u32 %v2808, 7
      %v2810 = vsub.s32 0, %v2809
      %v2811 = vrot.slane %v2806, %v2810
      %v2813 = vadd.f32 %v2790, %v2811
      %v2814 = vadd.f32 %v2791, %v2811
      %v2815 = vadd.f32 %v2792, %v2811
      %v2816 = vadd.f32 %v2793, %v2811
      %v2817 = vadd.f32 %v2794, %v2811
      %v2818 = vadd.f32 %v2795, %v2811
      %v2819 = vadd.f32 %v2796, %v2811
      %v2820 = vadd.f32 %v2797, %v2811
      %v2821 = vadd.f32 %v2798, %v2811
      %v2822 = vadd.f32 %v2799, %v2811
      %v2823 = vadd.f32 %v2800, %v2811
      %v2824 = vadd.f32 %v2801, %v2811
      %v2825 = vadd.f32 %v2802, %v2811
      %v2826 = vadd.f32 %v2803, %v2811
      %v2827 = vadd.f32 %v2804, %v2811
      %v2828 = vadd.f32 %v2805, %v2811
      %vm2829 = vcmask 130048
      %2830 = vst.msk [vmem:[%s634] sm:$0xff] %vm2829, %v2813
      %2831 = vst.msk [vmem:[%s634 + $0x8] sm:$0xff] %vm2829, %v2814
      %2832 = vst.msk [vmem:[%s634 + $0x10] sm:$0xff] %vm2829, %v2815
      %2833 = vst.msk [vmem:[%s634 + $0x18] sm:$0xff] %vm2829, %v2816
      %2834 = vst.msk [vmem:[%s634 + $0x20] sm:$0xff] %vm2829, %v2817
      %2835 = vst.msk [vmem:[%s634 + $0x28] sm:$0xff] %vm2829, %v2818
      %2836 = vst.msk [vmem:[%s634 + $0x30] sm:$0xff] %vm2829, %v2819
      %2837 = vst.msk [vmem:[%s634 + $0x38] sm:$0xff] %vm2829, %v2820
      %2838 = vst.msk [vmem:[%s634 + $0x40] sm:$0xff] %vm2829, %v2821
      %2839 = vst.msk [vmem:[%s634 + $0x48] sm:$0xff] %vm2829, %v2822
      %2840 = vst.msk [vmem:[%s634 + $0x50] sm:$0xff] %vm2829, %v2823
      %2841 = vst.msk [vmem:[%s634 + $0x58] sm:$0xff] %vm2829, %v2824
      %2842 = vst.msk [vmem:[%s634 + $0x60] sm:$0xff] %vm2829, %v2825
      %2843 = vst.msk [vmem:[%s634 + $0x68] sm:$0xff] %vm2829, %v2826
      %2844 = vst.msk [vmem:[%s634 + $0x70] sm:$0xff] %vm2829, %v2827
      %2845 = vst.msk [vmem:[%s634 + $0x78] sm:$0xff] %vm2829, %v2828
      %s2846 = smul.u32 16, %s26
      %p2847 = scmp.lt.s32.totalorder %s2846, 31
      %s2848 = scalar_select %p2847, %s2846, 31
      %s2849 = smul.addr %s2848, 8
      %s2850 = scalar_lea.vmem %s15, %s2849
      // Predicated region
      $region81: #{tpu_custom_call.1} parent=79 // pred_check
        %p2851 = pneg %p394
      $region82: #{tpu_custom_call.1} parent=79 // pred_check_branch
        %2853 = sbr.rel (%p2851) target = $region84
      $region83: #{tpu_custom_call.1} parent=79 // pred_region
        %s2854 = smul.u32 16, %s26
      $region84: #{tpu_custom_call.1} parent=79 // pred_fallthru
        _
    $region80: #{tpu_custom_call.1} parent=5 // pred_fallthru
      _
    %p2855 = scmp.le.s32.totalorder 2, %s21
    // Predicated region
    $region85: #{tpu_custom_call.1} parent=5 // pred_check
      %p2856 = pneg %p2855
    $region86: #{tpu_custom_call.1} parent=5 // pred_check_branch
      %2858 = sbr.rel (%p2856) target = $region88
    $region87: #{tpu_custom_call.1} parent=5 // pred_region
      %s2859 = ssub.s32 %s21, 2
      // Predicated region
      $region89: #{tpu_custom_call.1} parent=87 // pred_check
        %p2860 = pneg %p400
      $region90: #{tpu_custom_call.1} parent=87 // pred_check_branch
        %2862 = sbr.rel (%p2860) target = $region92
      $region91: #{tpu_custom_call.1} parent=87 // pred_region
        %s2863 = smul.u32 16, %s27
        %p2864 = scmp.lt.s32.totalorder %s2863, 31
        %s2865 = scalar_select %p2864, %s2863, 31
        %s2866 = smul.addr %s2865, 8
        %s2867 = scalar_lea.vmem %s15, %s2866
      $region92: #{tpu_custom_call.1} parent=87 // pred_fallthru
        _
    $region88: #{tpu_custom_call.1} parent=5 // pred_fallthru
      _
  $region6: #{tpu_custom_call.1} parent=0 // loop_footer
    %s25 = sadd.s32 1, %s21
  $region7: #{tpu_custom_call.1} parent=0 // loop_footer_branch
    %20 = sbr.rel target = $region3
  $region8: #{tpu_custom_call.1} parent=0 // loop_exit
    _

</llo_original>
